<compile_context>
chip_gen: v7x
topology: tpu7x:2x2x1
jax: 0.10.0
libtpu: 0.0.40
codegen_flags: <defaults>
</compile_context>

<pallas_src>
import jax
import jax.numpy as jnp
from jax import lax
from jax.experimental import pallas as pl
from jax.experimental.pallas import tpu as pltpu

_BN_EPS = 1e-5


def _round_up(v, m):
    return ((v + m - 1) // m) * m


# -----------------------------------------------------------------------------
# Static slab layouts (plain Python ints, shared by init-time packing and the
# kernel factory).
# -----------------------------------------------------------------------------
def _slab_layouts(layer_config, pred_hid):
    dims = list(layer_config)
    lanes = _round_up(max(max(dims), pred_hid), 128)

    # bf16 weight slab: every matmul weight; row offsets padded to 16 (bf16 tiling).
    w_layout, w_rows = {}, 0

    def add_w(name, din, dout):
        nonlocal w_rows
        w_layout[name] = (w_rows, din, dout)
        w_rows += _round_up(din, 16)

    for pre in ("s", "t"):
        for l in range(1, len(dims)):
            add_w(f"enc_{pre}_{l}", dims[l - 1], dims[l])
    rep = dims[-1]
    add_w("pool_w1", rep, rep)
    for pre in ("s", "t"):
        add_w(f"proj_{pre}_w1", rep, pred_hid)
        add_w(f"proj_{pre}_w2", pred_hid, rep)
    w_rows = _round_up(w_rows, 16)

    # f32 vector-parameter slab: one row per bias/gamma/beta/alpha/etc.
    p_layout, p_rows = {}, 0

    def add_p(name):
        nonlocal p_rows
        p_layout[name] = p_rows
        p_rows += 1

    for pre in ("s", "t"):
        for l in range(1, len(dims)):
            for p in ("b", "gamma", "beta", "alpha"):
                add_p(f"enc_{pre}_{l}_{p}")
    for p in ("b1", "gamma", "beta", "w2", "b2"):
        add_p(f"pool_{p}")
    for pre in ("s", "t"):
        for p in ("b1", "gamma", "beta", "alpha", "b2"):
            add_p(f"proj_{pre}_{p}")
    p_rows = _round_up(p_rows, 8)

    return dict(lanes=lanes, w_layout=w_layout, w_rows=w_rows,
                p_layout=p_layout, p_rows=p_rows)


# -----------------------------------------------------------------------------
# One-time parameter packing (outside the per-call path).
# -----------------------------------------------------------------------------
def pack_params(params, layer_config, pred_hid):
    lay = _slab_layouts(layer_config, pred_hid)
    lanes = lay["lanes"]
    w_slab = jnp.zeros((lay["w_rows"], lanes), jnp.float32)
    p_slab = jnp.zeros((lay["p_rows"], lanes), jnp.float32)

    def set_w(name, w):
        nonlocal w_slab
        r, din, dout = lay["w_layout"][name]
        w_slab = w_slab.at[r:r + din, 0:dout].set(jnp.asarray(w, jnp.float32))

    def set_row(name, vec):
        nonlocal p_slab
        row = lay["p_layout"][name]
        vec = jnp.asarray(vec, jnp.float32).reshape(-1)
        if vec.shape[0] == 1:                      # scalars broadcast across the row
            vec = jnp.broadcast_to(vec, (lanes,))
        p_slab = p_slab.at[row, 0:vec.shape[0]].set(vec)

    for pre, key in (("s", "student_encoder"), ("t", "teacher_encoder")):
        for l, lyr in enumerate(params[key], start=1):
            set_w(f"enc_{pre}_{l}", lyr["w"])
            set_row(f"enc_{pre}_{l}_b", lyr["b"])
            set_row(f"enc_{pre}_{l}_gamma", lyr["gamma"])
            set_row(f"enc_{pre}_{l}_beta", lyr["beta"])
            set_row(f"enc_{pre}_{l}_alpha", lyr["alpha"])

    pp = params["pool"]
    set_w("pool_w1", pp["w1"])
    set_row("pool_b1", pp["b1"])
    set_row("pool_gamma", pp["gamma"])
    set_row("pool_beta", pp["beta"])
    set_row("pool_w2", pp["w2"][:, 0])
    set_row("pool_b2", pp["b2"])

    for pre, key in (("s", "student_projector"), ("t", "teacher_projector")):
        pj = params[key]
        set_w(f"proj_{pre}_w1", pj["w1"])
        set_w(f"proj_{pre}_w2", pj["w2"])
        set_row(f"proj_{pre}_b1", pj["b1"])
        set_row(f"proj_{pre}_gamma", pj["gamma"])
        set_row(f"proj_{pre}_beta", pj["beta"])
        set_row(f"proj_{pre}_alpha", pj["alpha"])
        set_row(f"proj_{pre}_b2", pj["b2"])

    return w_slab.astype(jnp.bfloat16), p_slab


# -----------------------------------------------------------------------------
# Fused forward kernel (single VMEM-resident block, no grid).
# -----------------------------------------------------------------------------
def _make_fused_kernel(n, g, layer_config, pred_hid, out_rows, out_lanes, layouts):
    dims = list(layer_config)
    rep = dims[-1]
    w_layout = layouts["w_layout"]
    p_layout = layouts["p_layout"]
    f32, bf16 = jnp.float32, jnp.bfloat16

    def kernel(w_ref, p_ref, a_ref, x_ref, seg_ref, o_ref):
        pvals = p_ref[...]                                    # (p_rows, 128) f32, tiny

        def wget(name):                                       # bf16 weight tile
            r, din, dout = w_layout[name]
            return w_ref[r:r + din, 0:dout]

        def prow(name, width):                                # (1, width) f32 row
            r = p_layout[name]
            return lax.slice(pvals, (r, 0), (r + 1, width))

        def mm(a, b):                                         # MXU: bf16 in, f32 acc
            return jnp.dot(a.astype(bf16), b.astype(bf16),
                           preferred_element_type=f32)

        def bn(h, gamma, beta):                               # training-mode batch stats
            m = jnp.mean(h, axis=0, keepdims=True)
            v = jnp.mean((h - m) ** 2, axis=0, keepdims=True)
            return (h - m) * lax.rsqrt(v + _BN_EPS) * gamma + beta

        def prelu(h, alpha):
            return jnp.where(h > 0, h, alpha * h)

        # -- block-diagonal adjacency diag(a_view1, a_orig, a_view2):
        #    ONE MXU aggregation per layer instead of three.
        a_stack = a_ref[...]                                  # (3N, N) f32
        zn = jnp.zeros((n, n), f32)
        a_bd = jnp.concatenate([
            jnp.concatenate([a_stack[0:n], zn, zn], axis=1),
            jnp.concatenate([zn, a_stack[n:2 * n], zn], axis=1),
            jnp.concatenate([zn, zn, a_stack[2 * n:3 * n]], axis=1),
        ], axis=0).astype(bf16)                               # (3N, 3N)

        # -- encoders: rows [0,N)=view1 (student), [N,2N)=original (student),
        #    [2N,3N)=view2 (teacher).  BN stats per N-row pass.
        h = x_ref[...]                                        # (3N, Din) f32
        for l in range(1, len(dims)):
            dout = dims[l]
            xw_s = mm(h[0:2 * n], wget(f"enc_s_{l}"))         # (2N, dout)
            xw_t = mm(h[2 * n:3 * n], wget(f"enc_t_{l}"))     # (N,  dout)
            agg = mm(a_bd, jnp.concatenate([xw_s, xw_t], axis=0))   # (3N, dout)
            post = {pre: tuple(prow(f"enc_{pre}_{l}_{p}", dout)
                               for p in ("b", "gamma", "beta", "alpha"))
                    for pre in ("s", "t")}
            parts = []
            for br, pre in ((0, "s"), (1, "s"), (2, "t")):
                b, gamma, beta, alpha = post[pre]
                parts.append(prelu(bn(agg[br * n:(br + 1) * n] + b, gamma, beta), alpha))
            h = jnp.concatenate(parts, axis=0)                # (3N, dout) f32

        # -- GlobalAttention pool, all 3 branches at once via a block-diagonal
        #    (3N, 3G) segment matrix; gate BN stats per branch slice.
        gt = mm(h, wget("pool_w1")) + prow("pool_b1", rep)    # (3N, rep)
        pg, pb = prow("pool_gamma", rep), prow("pool_beta", rep)
        gt = jnp.concatenate(
            [jnp.maximum(bn(gt[br * n:(br + 1) * n], pg, pb), 0.0) for br in range(3)],
            axis=0)
        # (N,rep)@(rep,1) would waste an MXU pass: VPU multiply + lane reduce.
        score = jnp.sum(gt * prow("pool_w2", rep), axis=-1, keepdims=True) \
            + prow("pool_b2", 1)                              # (3N, 1) f32

        seg = seg_ref[...]                                    # (N, G) f32 one-hot
        zg = jnp.zeros((n, g), f32)
        seg_bd = jnp.concatenate([
            jnp.concatenate([seg, zg, zg], axis=1),
            jnp.concatenate([zg, seg, zg], axis=1),
            jnp.concatenate([zg, zg, seg], axis=1),
        ], axis=0)                                            # (3N, 3G)

        masked = jnp.where(seg_bd > 0, score, -1e30)          # (3N, 3G)
        mx = jnp.max(masked, axis=0, keepdims=True)
        e = jnp.exp(masked - mx) * seg_bd
        s = jnp.maximum(jnp.sum(e, axis=0, keepdims=True), 1e-30)  # empty-graph guard
        attn = e * pl.reciprocal(s, approx=True)
        # pooled[k, :] = sum_n attn[n, k] * h[n, :]  ->  (3G, rep)
        pooled = lax.dot_general(attn.astype(bf16), h.astype(bf16),
                                 (((0,), (0,)), ((), ())),
                                 preferred_element_type=f32)

        # -- projector MLP: Linear -> BN -> PReLU -> Linear
        def projector(hh, pre):
            b1 = prow(f"proj_{pre}_b1", pred_hid)
            gamma = prow(f"proj_{pre}_gamma", pred_hid)
            beta = prow(f"proj_{pre}_beta", pred_hid)
            alpha = prow(f"proj_{pre}_alpha", pred_hid)
            b2 = prow(f"proj_{pre}_b2", rep)
            z = prelu(bn(mm(hh, wget(f"proj_{pre}_w1")) + b1, gamma, beta), alpha)
            return mm(z, wget(f"proj_{pre}_w2")) + b2

        h1 = projector(pooled[0:g], "s")                      # student branch (view 1)
        h2 = projector(pooled[2 * g:3 * g], "t")              # teacher branch (view 2)
        emb = pooled[g:2 * g]                                 # embedding (original graph)

        # -- BYOL-style loss: mean_g( 2 - 2 * cos(h1_g, h2_g) )
        # TODO(synk): exact SocialED get_loss body is not in the provided snippet;
        # the symmetric variant is exactly 2x this value (h1/h2 swap is identical).
        def l2n(v):
            return v * lax.rsqrt(jnp.maximum(jnp.sum(v * v, axis=-1, keepdims=True), 1e-24))

        per = 2.0 - 2.0 * jnp.sum(l2n(h1) * l2n(h2), axis=-1, keepdims=True)   # (G, 1)
        loss = jnp.mean(per, axis=0, keepdims=True)                            # (1, 1)

        # -- single unmasked lane-dense store: rows [0,G)=emb, row G=loss.
        if out_lanes > rep:
            emb_rows = jnp.concatenate(
                [emb, jnp.zeros((g, out_lanes - rep), f32)], axis=1)
        else:
            emb_rows = emb
        rows = [emb_rows, jnp.broadcast_to(loss, (1, out_lanes))]
        if out_rows - g - 1 > 0:
            rows.append(jnp.zeros((out_rows - g - 1, out_lanes), f32))
        o_ref[...] = jnp.concatenate(rows, axis=0)

    return kernel


# -----------------------------------------------------------------------------
# Wrapper factory: one pallas_call, 5 packed VMEM inputs, 1 output slab.
# -----------------------------------------------------------------------------
def make_graph_level_forward(layer_config, pred_hid, n, g):
    layouts = _slab_layouts(layer_config, pred_hid)
    rep = layer_config[-1]
    out_rows = _round_up(g + 1, 8)
    out_lanes = _round_up(rep, 128)
    kernel = _make_fused_kernel(n, g, layer_config, pred_hid, out_rows, out_lanes, layouts)
    vmem = pl.BlockSpec(memory_space=pltpu.MemorySpace.VMEM)
    call = pl.pallas_call(
        kernel,
        out_shape=jax.ShapeDtypeStruct((out_rows, out_lanes), jnp.float32),
        in_specs=[vmem] * 5,
        out_specs=vmem,
    )

    def forward(w_slab, p_slab, a1, a0, a2, x1, x0, x2, seg_onehot):
        # Only per-call wrapper HLOs: two row-stacks (branch order:
        # view1 / original / view2).  bf16 casts happen inside the kernel.
        a_stack = jnp.concatenate([a1, a0, a2], axis=0).astype(jnp.float32)
        x_stack = jnp.concatenate([x1, x0, x2], axis=0).astype(jnp.float32)
        out = call(w_slab, p_slab, a_stack, x_stack, seg_onehot.astype(jnp.float32))
        return out[:g, :rep], out[g, 0]

    return forward


# -----------------------------------------------------------------------------
# Deterministic parameter / input construction
# -----------------------------------------------------------------------------
def _linear_init(key, fan_in, fan_out):
    k1, k2 = jax.random.split(key)
    bound = 1.0 / float(fan_in) ** 0.5
    w = jax.random.uniform(k1, (fan_in, fan_out), jnp.float32, -bound, bound)
    b = jax.random.uniform(k2, (1, fan_out), jnp.float32, -bound, bound)
    return w, b


def init_params(key, layer_config, pred_hid):
    keys = iter(jax.random.split(key, 16))
    rep = layer_config[-1]

    def gcn_layer_params(d_in, d_out):
        w, b = _linear_init(next(keys), d_in, d_out)
        return dict(w=w, b=b,
                    gamma=jnp.ones((1, d_out), jnp.float32),
                    beta=jnp.zeros((1, d_out), jnp.float32),
                    alpha=jnp.full((1, 1), 0.25, jnp.float32))

    encoder = [gcn_layer_params(layer_config[i - 1], layer_config[i])
               for i in range(1, len(layer_config))]

    def projector_params():
        w1, b1 = _linear_init(next(keys), rep, pred_hid)
        w2, b2 = _linear_init(next(keys), pred_hid, rep)
        return dict(w1=w1, b1=b1,
                    gamma=jnp.ones((1, pred_hid), jnp.float32),
                    beta=jnp.zeros((1, pred_hid), jnp.float32),
                    alpha=jnp.full((1, 1), 0.25, jnp.float32),
                    w2=w2, b2=b2)

    student_projector = projector_params()

    pw1, pb1 = _linear_init(next(keys), rep, rep)
    pw2, pb2 = _linear_init(next(keys), rep, 1)
    pool = dict(w1=pw1, b1=pb1,
                gamma=jnp.ones((1, rep), jnp.float32),
                beta=jnp.zeros((1, rep), jnp.float32),
                w2=pw2, b2=pb2)

    copy = lambda t: jax.tree_util.tree_map(jnp.copy, t)
    # teacher modules are deepcopies of the student at __init__.
    return dict(student_encoder=encoder,
                teacher_encoder=copy(encoder),
                student_projector=student_projector,
                teacher_projector=copy(student_projector),
                pool=pool)


def normalized_adjacency(edge_index, num_nodes):
    src, dst = edge_index[0], edge_index[1]
    a = jnp.zeros((num_nodes, num_nodes), jnp.float32)
    a = a.at[src, dst].set(1.0)
    a = a.at[dst, src].set(1.0)                       # undirected
    a = a + jnp.eye(num_nodes, dtype=jnp.float32)     # GCN self loops
    deg = a.sum(axis=1)
    dis = jnp.where(deg > 0, 1.0 / jnp.sqrt(deg), 0.0)
    return a * dis[:, None] * dis[None, :]            # D^-1/2 (A+I) D^-1/2


if __name__ == "__main__":
    key = jax.random.PRNGKey(0)
    N, G = 16, 4                      # 16 nodes, 4 graphs of 4 nodes
    layer_config = [32, 64, 32]       # in_dim, hidden, rep_dim
    G_pred_hid = 64

    nodes_per_graph = N // G
    src, dst = [], []
    for gid in range(G):              # ring inside each graph
        base = gid * nodes_per_graph
        for i in range(nodes_per_graph):
            src.append(base + i)
            dst.append(base + (i + 1) % nodes_per_graph)
    edge_index = jnp.array([src, dst], dtype=jnp.int32)
    a_hat = normalized_adjacency(edge_index, N)

    batch_vec = jnp.repeat(jnp.arange(G, dtype=jnp.int32), nodes_per_graph)
    seg_onehot = jax.nn.one_hot(batch_vec, G, dtype=jnp.float32)   # (N, G)

    kx, kx1, kx2, kp = jax.random.split(key, 4)
    x = jax.random.normal(kx, (N, layer_config[0]), jnp.float32)
    x1 = jax.random.normal(kx1, (N, layer_config[0]), jnp.float32)
    x2 = jax.random.normal(kx2, (N, layer_config[0]), jnp.float32)

    params = init_params(kp, layer_config, G_pred_hid)
    w_slab, p_slab = pack_params(params, layer_config, G_pred_hid)  # init-time packing

    fwd = jax.jit(make_graph_level_forward(layer_config, G_pred_hid, N, G))
    emb, loss = fwd(w_slab, p_slab, a_hat, a_hat, a_hat, x1, x, x2, seg_onehot)
    emb, loss = jax.block_until_ready((emb, loss))

    res_emb = jax.device_get(emb).tolist()   # mirrors emb.detach().cpu().numpy().tolist()
    assert len(res_emb) == G and len(res_emb[0]) == layer_config[-1]
    assert bool(jnp.isfinite(loss))
    print("KERNEL_OK")
</pallas_src>

<mosaic_0001>
module attributes {stable_mosaic.version = 11 : i64} {
  func.func @kernel(%arg0: memref<416x128xbf16, #tpu.memory_space<vmem>>, %arg1: memref<32x128xf32, #tpu.memory_space<vmem>>, %arg2: memref<48x16xf32, #tpu.memory_space<vmem>>, %arg3: memref<48x32xf32, #tpu.memory_space<vmem>>, %arg4: memref<16x4xf32, #tpu.memory_space<vmem>>, %arg5: memref<8x128xf32, #tpu.memory_space<vmem>>) attributes {dimension_semantics = [], scalar_prefetch = 0 : i64, scratch_operands = 0 : i64, tpu.core_type = #tpu.core_type<tc>} {
    %c0 = arith.constant 0 : index
    %c0_0 = arith.constant 0 : index
    %0 = vector.load %arg1[%c0, %c0_0] : memref<32x128xf32, #tpu.memory_space<vmem>>, vector<32x128xf32>
    %c0_1 = arith.constant 0 : index
    %c0_2 = arith.constant 0 : index
    %1 = vector.load %arg2[%c0_1, %c0_2] : memref<48x16xf32, #tpu.memory_space<vmem>>, vector<48x16xf32>
    %cst = arith.constant 0.000000e+00 : f32
    %2 = vector.broadcast %cst : f32 to vector<16x16xf32>
    %3 = vector.extract_strided_slice %1 {offsets = [0, 0], sizes = [16, 16], strides = [1, 1]} : vector<48x16xf32> to vector<16x16xf32>
    %4 = tpu.concatenate %3, %2, %2 in 1 : vector<16x16xf32>, vector<16x16xf32>, vector<16x16xf32> -> vector<16x48xf32>
    %5 = vector.extract_strided_slice %1 {offsets = [16, 0], sizes = [16, 16], strides = [1, 1]} : vector<48x16xf32> to vector<16x16xf32>
    %6 = tpu.concatenate %2, %5, %2 in 1 : vector<16x16xf32>, vector<16x16xf32>, vector<16x16xf32> -> vector<16x48xf32>
    %7 = vector.extract_strided_slice %1 {offsets = [32, 0], sizes = [16, 16], strides = [1, 1]} : vector<48x16xf32> to vector<16x16xf32>
    %8 = tpu.concatenate %2, %2, %7 in 1 : vector<16x16xf32>, vector<16x16xf32>, vector<16x16xf32> -> vector<16x48xf32>
    %9 = tpu.concatenate %4, %6, %8 in 0 : vector<16x48xf32>, vector<16x48xf32>, vector<16x48xf32> -> vector<48x48xf32>
    %10 = arith.truncf %9 : vector<48x48xf32> to vector<48x48xbf16>
    %c0_3 = arith.constant 0 : index
    %c0_4 = arith.constant 0 : index
    %11 = vector.load %arg3[%c0_3, %c0_4] : memref<48x32xf32, #tpu.memory_space<vmem>>, vector<48x32xf32>
    %12 = vector.extract_strided_slice %11 {offsets = [0, 0], sizes = [32, 32], strides = [1, 1]} : vector<48x32xf32> to vector<32x32xf32>
    %c0_5 = arith.constant 0 : index
    %c0_6 = arith.constant 0 : index
    %13 = vector.load %arg0[%c0_5, %c0_6] : memref<416x128xbf16, #tpu.memory_space<vmem>>, vector<32x64xbf16>
    %14 = arith.truncf %12 : vector<32x32xf32> to vector<32x32xbf16>
    %cst_7 = arith.constant dense<0.000000e+00> : vector<32x64xf32>
    %15 = tpu.matmul %14, %13, %cst_7 {dimension_numbers = #tpu.dot_dimension_numbers<[1], [0], [0], [1], [0, 0, 1, 1], [], []>} : vector<32x32xbf16>, vector<32x64xbf16>, vector<32x64xf32> -> vector<32x64xf32>
    %16 = vector.extract_strided_slice %11 {offsets = [32, 0], sizes = [16, 32], strides = [1, 1]} : vector<48x32xf32> to vector<16x32xf32>
    %c96 = arith.constant 96 : index
    %c0_8 = arith.constant 0 : index
    %17 = vector.load %arg0[%c96, %c0_8] : memref<416x128xbf16, #tpu.memory_space<vmem>>, vector<32x64xbf16>
    %18 = arith.truncf %16 : vector<16x32xf32> to vector<16x32xbf16>
    %cst_9 = arith.constant dense<0.000000e+00> : vector<16x64xf32>
    %19 = tpu.matmul %18, %17, %cst_9 {dimension_numbers = #tpu.dot_dimension_numbers<[1], [0], [0], [1], [0, 0, 1, 1], [], []>} : vector<16x32xbf16>, vector<32x64xbf16>, vector<16x64xf32> -> vector<16x64xf32>
    %20 = tpu.concatenate %15, %19 in 0 : vector<32x64xf32>, vector<16x64xf32> -> vector<48x64xf32>
    %21 = arith.truncf %20 : vector<48x64xf32> to vector<48x64xbf16>
    %cst_10 = arith.constant dense<0.000000e+00> : vector<48x64xf32>
    %22 = tpu.matmul %10, %21, %cst_10 {dimension_numbers = #tpu.dot_dimension_numbers<[1], [0], [0], [1], [0, 0, 1, 1], [], []>} : vector<48x48xbf16>, vector<48x64xbf16>, vector<48x64xf32> -> vector<48x64xf32>
    %23 = vector.extract_strided_slice %0 {offsets = [0, 0], sizes = [1, 64], strides = [1, 1]} : vector<32x128xf32> to vector<1x64xf32>
    %24 = vector.extract_strided_slice %0 {offsets = [1, 0], sizes = [1, 64], strides = [1, 1]} : vector<32x128xf32> to vector<1x64xf32>
    %25 = vector.extract_strided_slice %0 {offsets = [2, 0], sizes = [1, 64], strides = [1, 1]} : vector<32x128xf32> to vector<1x64xf32>
    %26 = vector.extract_strided_slice %0 {offsets = [3, 0], sizes = [1, 64], strides = [1, 1]} : vector<32x128xf32> to vector<1x64xf32>
    %27 = vector.extract_strided_slice %0 {offsets = [8, 0], sizes = [1, 64], strides = [1, 1]} : vector<32x128xf32> to vector<1x64xf32>
    %28 = vector.extract_strided_slice %0 {offsets = [9, 0], sizes = [1, 64], strides = [1, 1]} : vector<32x128xf32> to vector<1x64xf32>
    %29 = vector.extract_strided_slice %0 {offsets = [10, 0], sizes = [1, 64], strides = [1, 1]} : vector<32x128xf32> to vector<1x64xf32>
    %30 = vector.extract_strided_slice %0 {offsets = [11, 0], sizes = [1, 64], strides = [1, 1]} : vector<32x128xf32> to vector<1x64xf32>
    %31 = vector.extract_strided_slice %22 {offsets = [0, 0], sizes = [16, 64], strides = [1, 1]} : vector<48x64xf32> to vector<16x64xf32>
    %32 = vector.broadcast %23 : vector<1x64xf32> to vector<16x64xf32>
    %33 = arith.addf %31, %32 : vector<16x64xf32>
    %cst_11 = arith.constant dense<0.000000e+00> : vector<64xf32>
    %34 = vector.multi_reduction <add>, %33, %cst_11 [0] : vector<16x64xf32> to vector<64xf32>
    %35 = vector.shape_cast %34 : vector<64xf32> to vector<1x64xf32>
    %cst_12 = arith.constant 1.600000e+01 : f32
    %36 = vector.broadcast %cst_12 : f32 to vector<1x64xf32>
    %37 = arith.divf %35, %36 : vector<1x64xf32>
    %38 = vector.broadcast %37 : vector<1x64xf32> to vector<16x64xf32>
    %39 = arith.subf %33, %38 : vector<16x64xf32>
    %40 = arith.mulf %39, %39 : vector<16x64xf32>
    %cst_13 = arith.constant dense<0.000000e+00> : vector<64xf32>
    %41 = vector.multi_reduction <add>, %40, %cst_13 [0] : vector<16x64xf32> to vector<64xf32>
    %42 = vector.shape_cast %41 : vector<64xf32> to vector<1x64xf32>
    %cst_14 = arith.constant 1.600000e+01 : f32
    %43 = vector.broadcast %cst_14 : f32 to vector<1x64xf32>
    %44 = arith.divf %42, %43 : vector<1x64xf32>
    %45 = vector.broadcast %37 : vector<1x64xf32> to vector<16x64xf32>
    %46 = arith.subf %33, %45 : vector<16x64xf32>
    %cst_15 = arith.constant 9.99999974E-6 : f32
    %47 = vector.broadcast %cst_15 : f32 to vector<1x64xf32>
    %48 = arith.addf %44, %47 : vector<1x64xf32>
    %49 = math.rsqrt %48 : vector<1x64xf32>
    %50 = vector.broadcast %49 : vector<1x64xf32> to vector<16x64xf32>
    %51 = arith.mulf %46, %50 : vector<16x64xf32>
    %52 = vector.broadcast %24 : vector<1x64xf32> to vector<16x64xf32>
    %53 = arith.mulf %51, %52 : vector<16x64xf32>
    %54 = vector.broadcast %25 : vector<1x64xf32> to vector<16x64xf32>
    %55 = arith.addf %53, %54 : vector<16x64xf32>
    %cst_16 = arith.constant 0.000000e+00 : f32
    %56 = vector.broadcast %cst_16 : f32 to vector<16x64xf32>
    %57 = arith.cmpf ogt, %55, %56 : vector<16x64xf32>
    %58 = vector.broadcast %26 : vector<1x64xf32> to vector<16x64xf32>
    %59 = arith.mulf %58, %55 : vector<16x64xf32>
    %60 = arith.select %57, %55, %59 : vector<16x64xi1>, vector<16x64xf32>
    %61 = vector.extract_strided_slice %22 {offsets = [16, 0], sizes = [16, 64], strides = [1, 1]} : vector<48x64xf32> to vector<16x64xf32>
    %62 = vector.broadcast %23 : vector<1x64xf32> to vector<16x64xf32>
    %63 = arith.addf %61, %62 : vector<16x64xf32>
    %cst_17 = arith.constant dense<0.000000e+00> : vector<64xf32>
    %64 = vector.multi_reduction <add>, %63, %cst_17 [0] : vector<16x64xf32> to vector<64xf32>
    %65 = vector.shape_cast %64 : vector<64xf32> to vector<1x64xf32>
    %cst_18 = arith.constant 1.600000e+01 : f32
    %66 = vector.broadcast %cst_18 : f32 to vector<1x64xf32>
    %67 = arith.divf %65, %66 : vector<1x64xf32>
    %68 = vector.broadcast %67 : vector<1x64xf32> to vector<16x64xf32>
    %69 = arith.subf %63, %68 : vector<16x64xf32>
    %70 = arith.mulf %69, %69 : vector<16x64xf32>
    %cst_19 = arith.constant dense<0.000000e+00> : vector<64xf32>
    %71 = vector.multi_reduction <add>, %70, %cst_19 [0] : vector<16x64xf32> to vector<64xf32>
    %72 = vector.shape_cast %71 : vector<64xf32> to vector<1x64xf32>
    %cst_20 = arith.constant 1.600000e+01 : f32
    %73 = vector.broadcast %cst_20 : f32 to vector<1x64xf32>
    %74 = arith.divf %72, %73 : vector<1x64xf32>
    %75 = vector.broadcast %67 : vector<1x64xf32> to vector<16x64xf32>
    %76 = arith.subf %63, %75 : vector<16x64xf32>
    %cst_21 = arith.constant 9.99999974E-6 : f32
    %77 = vector.broadcast %cst_21 : f32 to vector<1x64xf32>
    %78 = arith.addf %74, %77 : vector<1x64xf32>
    %79 = math.rsqrt %78 : vector<1x64xf32>
    %80 = vector.broadcast %79 : vector<1x64xf32> to vector<16x64xf32>
    %81 = arith.mulf %76, %80 : vector<16x64xf32>
    %82 = vector.broadcast %24 : vector<1x64xf32> to vector<16x64xf32>
    %83 = arith.mulf %81, %82 : vector<16x64xf32>
    %84 = vector.broadcast %25 : vector<1x64xf32> to vector<16x64xf32>
    %85 = arith.addf %83, %84 : vector<16x64xf32>
    %cst_22 = arith.constant 0.000000e+00 : f32
    %86 = vector.broadcast %cst_22 : f32 to vector<16x64xf32>
    %87 = arith.cmpf ogt, %85, %86 : vector<16x64xf32>
    %88 = vector.broadcast %26 : vector<1x64xf32> to vector<16x64xf32>
    %89 = arith.mulf %88, %85 : vector<16x64xf32>
    %90 = arith.select %87, %85, %89 : vector<16x64xi1>, vector<16x64xf32>
    %91 = vector.extract_strided_slice %22 {offsets = [32, 0], sizes = [16, 64], strides = [1, 1]} : vector<48x64xf32> to vector<16x64xf32>
    %92 = vector.broadcast %27 : vector<1x64xf32> to vector<16x64xf32>
    %93 = arith.addf %91, %92 : vector<16x64xf32>
    %cst_23 = arith.constant dense<0.000000e+00> : vector<64xf32>
    %94 = vector.multi_reduction <add>, %93, %cst_23 [0] : vector<16x64xf32> to vector<64xf32>
    %95 = vector.shape_cast %94 : vector<64xf32> to vector<1x64xf32>
    %cst_24 = arith.constant 1.600000e+01 : f32
    %96 = vector.broadcast %cst_24 : f32 to vector<1x64xf32>
    %97 = arith.divf %95, %96 : vector<1x64xf32>
    %98 = vector.broadcast %97 : vector<1x64xf32> to vector<16x64xf32>
    %99 = arith.subf %93, %98 : vector<16x64xf32>
    %100 = arith.mulf %99, %99 : vector<16x64xf32>
    %cst_25 = arith.constant dense<0.000000e+00> : vector<64xf32>
    %101 = vector.multi_reduction <add>, %100, %cst_25 [0] : vector<16x64xf32> to vector<64xf32>
    %102 = vector.shape_cast %101 : vector<64xf32> to vector<1x64xf32>
    %cst_26 = arith.constant 1.600000e+01 : f32
    %103 = vector.broadcast %cst_26 : f32 to vector<1x64xf32>
    %104 = arith.divf %102, %103 : vector<1x64xf32>
    %105 = vector.broadcast %97 : vector<1x64xf32> to vector<16x64xf32>
    %106 = arith.subf %93, %105 : vector<16x64xf32>
    %cst_27 = arith.constant 9.99999974E-6 : f32
    %107 = vector.broadcast %cst_27 : f32 to vector<1x64xf32>
    %108 = arith.addf %104, %107 : vector<1x64xf32>
    %109 = math.rsqrt %108 : vector<1x64xf32>
    %110 = vector.broadcast %109 : vector<1x64xf32> to vector<16x64xf32>
    %111 = arith.mulf %106, %110 : vector<16x64xf32>
    %112 = vector.broadcast %28 : vector<1x64xf32> to vector<16x64xf32>
    %113 = arith.mulf %111, %112 : vector<16x64xf32>
    %114 = vector.broadcast %29 : vector<1x64xf32> to vector<16x64xf32>
    %115 = arith.addf %113, %114 : vector<16x64xf32>
    %cst_28 = arith.constant 0.000000e+00 : f32
    %116 = vector.broadcast %cst_28 : f32 to vector<16x64xf32>
    %117 = arith.cmpf ogt, %115, %116 : vector<16x64xf32>
    %118 = vector.broadcast %30 : vector<1x64xf32> to vector<16x64xf32>
    %119 = arith.mulf %118, %115 : vector<16x64xf32>
    %120 = arith.select %117, %115, %119 : vector<16x64xi1>, vector<16x64xf32>
    %121 = tpu.concatenate %60, %90, %120 in 0 : vector<16x64xf32>, vector<16x64xf32>, vector<16x64xf32> -> vector<48x64xf32>
    %122 = vector.extract_strided_slice %121 {offsets = [0, 0], sizes = [32, 64], strides = [1, 1]} : vector<48x64xf32> to vector<32x64xf32>
    %c32 = arith.constant 32 : index
    %c0_29 = arith.constant 0 : index
    %123 = vector.load %arg0[%c32, %c0_29] : memref<416x128xbf16, #tpu.memory_space<vmem>>, vector<64x32xbf16>
    %124 = arith.truncf %122 : vector<32x64xf32> to vector<32x64xbf16>
    %cst_30 = arith.constant dense<0.000000e+00> : vector<32x32xf32>
    %125 = tpu.matmul %124, %123, %cst_30 {dimension_numbers = #tpu.dot_dimension_numbers<[1], [0], [0], [1], [0, 0, 1, 1], [], []>} : vector<32x64xbf16>, vector<64x32xbf16>, vector<32x32xf32> -> vector<32x32xf32>
    %126 = vector.extract_strided_slice %121 {offsets = [32, 0], sizes = [16, 64], strides = [1, 1]} : vector<48x64xf32> to vector<16x64xf32>
    %c128 = arith.constant 128 : index
    %c0_31 = arith.constant 0 : index
    %127 = vector.load %arg0[%c128, %c0_31] : memref<416x128xbf16, #tpu.memory_space<vmem>>, vector<64x32xbf16>
    %128 = arith.truncf %126 : vector<16x64xf32> to vector<16x64xbf16>
    %cst_32 = arith.constant dense<0.000000e+00> : vector<16x32xf32>
    %129 = tpu.matmul %128, %127, %cst_32 {dimension_numbers = #tpu.dot_dimension_numbers<[1], [0], [0], [1], [0, 0, 1, 1], [], []>} : vector<16x64xbf16>, vector<64x32xbf16>, vector<16x32xf32> -> vector<16x32xf32>
    %130 = tpu.concatenate %125, %129 in 0 : vector<32x32xf32>, vector<16x32xf32> -> vector<48x32xf32>
    %131 = arith.truncf %130 : vector<48x32xf32> to vector<48x32xbf16>
    %cst_33 = arith.constant dense<0.000000e+00> : vector<48x32xf32>
    %132 = tpu.matmul %10, %131, %cst_33 {dimension_numbers = #tpu.dot_dimension_numbers<[1], [0], [0], [1], [0, 0, 1, 1], [], []>} : vector<48x48xbf16>, vector<48x32xbf16>, vector<48x32xf32> -> vector<48x32xf32>
    %133 = vector.extract_strided_slice %0 {offsets = [4, 0], sizes = [1, 32], strides = [1, 1]} : vector<32x128xf32> to vector<1x32xf32>
    %134 = vector.extract_strided_slice %0 {offsets = [5, 0], sizes = [1, 32], strides = [1, 1]} : vector<32x128xf32> to vector<1x32xf32>
    %135 = vector.extract_strided_slice %0 {offsets = [6, 0], sizes = [1, 32], strides = [1, 1]} : vector<32x128xf32> to vector<1x32xf32>
    %136 = vector.extract_strided_slice %0 {offsets = [7, 0], sizes = [1, 32], strides = [1, 1]} : vector<32x128xf32> to vector<1x32xf32>
    %137 = vector.extract_strided_slice %0 {offsets = [12, 0], sizes = [1, 32], strides = [1, 1]} : vector<32x128xf32> to vector<1x32xf32>
    %138 = vector.extract_strided_slice %0 {offsets = [13, 0], sizes = [1, 32], strides = [1, 1]} : vector<32x128xf32> to vector<1x32xf32>
    %139 = vector.extract_strided_slice %0 {offsets = [14, 0], sizes = [1, 32], strides = [1, 1]} : vector<32x128xf32> to vector<1x32xf32>
    %140 = vector.extract_strided_slice %0 {offsets = [15, 0], sizes = [1, 32], strides = [1, 1]} : vector<32x128xf32> to vector<1x32xf32>
    %141 = vector.extract_strided_slice %132 {offsets = [0, 0], sizes = [16, 32], strides = [1, 1]} : vector<48x32xf32> to vector<16x32xf32>
    %142 = vector.broadcast %133 : vector<1x32xf32> to vector<16x32xf32>
    %143 = arith.addf %141, %142 : vector<16x32xf32>
    %cst_34 = arith.constant dense<0.000000e+00> : vector<32xf32>
    %144 = vector.multi_reduction <add>, %143, %cst_34 [0] : vector<16x32xf32> to vector<32xf32>
    %145 = vector.shape_cast %144 : vector<32xf32> to vector<1x32xf32>
    %cst_35 = arith.constant 1.600000e+01 : f32
    %146 = vector.broadcast %cst_35 : f32 to vector<1x32xf32>
    %147 = arith.divf %145, %146 : vector<1x32xf32>
    %148 = vector.broadcast %147 : vector<1x32xf32> to vector<16x32xf32>
    %149 = arith.subf %143, %148 : vector<16x32xf32>
    %150 = arith.mulf %149, %149 : vector<16x32xf32>
    %cst_36 = arith.constant dense<0.000000e+00> : vector<32xf32>
    %151 = vector.multi_reduction <add>, %150, %cst_36 [0] : vector<16x32xf32> to vector<32xf32>
    %152 = vector.shape_cast %151 : vector<32xf32> to vector<1x32xf32>
    %cst_37 = arith.constant 1.600000e+01 : f32
    %153 = vector.broadcast %cst_37 : f32 to vector<1x32xf32>
    %154 = arith.divf %152, %153 : vector<1x32xf32>
    %155 = vector.broadcast %147 : vector<1x32xf32> to vector<16x32xf32>
    %156 = arith.subf %143, %155 : vector<16x32xf32>
    %cst_38 = arith.constant 9.99999974E-6 : f32
    %157 = vector.broadcast %cst_38 : f32 to vector<1x32xf32>
    %158 = arith.addf %154, %157 : vector<1x32xf32>
    %159 = math.rsqrt %158 : vector<1x32xf32>
    %160 = vector.broadcast %159 : vector<1x32xf32> to vector<16x32xf32>
    %161 = arith.mulf %156, %160 : vector<16x32xf32>
    %162 = vector.broadcast %134 : vector<1x32xf32> to vector<16x32xf32>
    %163 = arith.mulf %161, %162 : vector<16x32xf32>
    %164 = vector.broadcast %135 : vector<1x32xf32> to vector<16x32xf32>
    %165 = arith.addf %163, %164 : vector<16x32xf32>
    %cst_39 = arith.constant 0.000000e+00 : f32
    %166 = vector.broadcast %cst_39 : f32 to vector<16x32xf32>
    %167 = arith.cmpf ogt, %165, %166 : vector<16x32xf32>
    %168 = vector.broadcast %136 : vector<1x32xf32> to vector<16x32xf32>
    %169 = arith.mulf %168, %165 : vector<16x32xf32>
    %170 = arith.select %167, %165, %169 : vector<16x32xi1>, vector<16x32xf32>
    %171 = vector.extract_strided_slice %132 {offsets = [16, 0], sizes = [16, 32], strides = [1, 1]} : vector<48x32xf32> to vector<16x32xf32>
    %172 = vector.broadcast %133 : vector<1x32xf32> to vector<16x32xf32>
    %173 = arith.addf %171, %172 : vector<16x32xf32>
    %cst_40 = arith.constant dense<0.000000e+00> : vector<32xf32>
    %174 = vector.multi_reduction <add>, %173, %cst_40 [0] : vector<16x32xf32> to vector<32xf32>
    %175 = vector.shape_cast %174 : vector<32xf32> to vector<1x32xf32>
    %cst_41 = arith.constant 1.600000e+01 : f32
    %176 = vector.broadcast %cst_41 : f32 to vector<1x32xf32>
    %177 = arith.divf %175, %176 : vector<1x32xf32>
    %178 = vector.broadcast %177 : vector<1x32xf32> to vector<16x32xf32>
    %179 = arith.subf %173, %178 : vector<16x32xf32>
    %180 = arith.mulf %179, %179 : vector<16x32xf32>
    %cst_42 = arith.constant dense<0.000000e+00> : vector<32xf32>
    %181 = vector.multi_reduction <add>, %180, %cst_42 [0] : vector<16x32xf32> to vector<32xf32>
    %182 = vector.shape_cast %181 : vector<32xf32> to vector<1x32xf32>
    %cst_43 = arith.constant 1.600000e+01 : f32
    %183 = vector.broadcast %cst_43 : f32 to vector<1x32xf32>
    %184 = arith.divf %182, %183 : vector<1x32xf32>
    %185 = vector.broadcast %177 : vector<1x32xf32> to vector<16x32xf32>
    %186 = arith.subf %173, %185 : vector<16x32xf32>
    %cst_44 = arith.constant 9.99999974E-6 : f32
    %187 = vector.broadcast %cst_44 : f32 to vector<1x32xf32>
    %188 = arith.addf %184, %187 : vector<1x32xf32>
    %189 = math.rsqrt %188 : vector<1x32xf32>
    %190 = vector.broadcast %189 : vector<1x32xf32> to vector<16x32xf32>
    %191 = arith.mulf %186, %190 : vector<16x32xf32>
    %192 = vector.broadcast %134 : vector<1x32xf32> to vector<16x32xf32>
    %193 = arith.mulf %191, %192 : vector<16x32xf32>
    %194 = vector.broadcast %135 : vector<1x32xf32> to vector<16x32xf32>
    %195 = arith.addf %193, %194 : vector<16x32xf32>
    %cst_45 = arith.constant 0.000000e+00 : f32
    %196 = vector.broadcast %cst_45 : f32 to vector<16x32xf32>
    %197 = arith.cmpf ogt, %195, %196 : vector<16x32xf32>
    %198 = vector.broadcast %136 : vector<1x32xf32> to vector<16x32xf32>
    %199 = arith.mulf %198, %195 : vector<16x32xf32>
    %200 = arith.select %197, %195, %199 : vector<16x32xi1>, vector<16x32xf32>
    %201 = vector.extract_strided_slice %132 {offsets = [32, 0], sizes = [16, 32], strides = [1, 1]} : vector<48x32xf32> to vector<16x32xf32>
    %202 = vector.broadcast %137 : vector<1x32xf32> to vector<16x32xf32>
    %203 = arith.addf %201, %202 : vector<16x32xf32>
    %cst_46 = arith.constant dense<0.000000e+00> : vector<32xf32>
    %204 = vector.multi_reduction <add>, %203, %cst_46 [0] : vector<16x32xf32> to vector<32xf32>
    %205 = vector.shape_cast %204 : vector<32xf32> to vector<1x32xf32>
    %cst_47 = arith.constant 1.600000e+01 : f32
    %206 = vector.broadcast %cst_47 : f32 to vector<1x32xf32>
    %207 = arith.divf %205, %206 : vector<1x32xf32>
    %208 = vector.broadcast %207 : vector<1x32xf32> to vector<16x32xf32>
    %209 = arith.subf %203, %208 : vector<16x32xf32>
    %210 = arith.mulf %209, %209 : vector<16x32xf32>
    %cst_48 = arith.constant dense<0.000000e+00> : vector<32xf32>
    %211 = vector.multi_reduction <add>, %210, %cst_48 [0] : vector<16x32xf32> to vector<32xf32>
    %212 = vector.shape_cast %211 : vector<32xf32> to vector<1x32xf32>
    %cst_49 = arith.constant 1.600000e+01 : f32
    %213 = vector.broadcast %cst_49 : f32 to vector<1x32xf32>
    %214 = arith.divf %212, %213 : vector<1x32xf32>
    %215 = vector.broadcast %207 : vector<1x32xf32> to vector<16x32xf32>
    %216 = arith.subf %203, %215 : vector<16x32xf32>
    %cst_50 = arith.constant 9.99999974E-6 : f32
    %217 = vector.broadcast %cst_50 : f32 to vector<1x32xf32>
    %218 = arith.addf %214, %217 : vector<1x32xf32>
    %219 = math.rsqrt %218 : vector<1x32xf32>
    %220 = vector.broadcast %219 : vector<1x32xf32> to vector<16x32xf32>
    %221 = arith.mulf %216, %220 : vector<16x32xf32>
    %222 = vector.broadcast %138 : vector<1x32xf32> to vector<16x32xf32>
    %223 = arith.mulf %221, %222 : vector<16x32xf32>
    %224 = vector.broadcast %139 : vector<1x32xf32> to vector<16x32xf32>
    %225 = arith.addf %223, %224 : vector<16x32xf32>
    %cst_51 = arith.constant 0.000000e+00 : f32
    %226 = vector.broadcast %cst_51 : f32 to vector<16x32xf32>
    %227 = arith.cmpf ogt, %225, %226 : vector<16x32xf32>
    %228 = vector.broadcast %140 : vector<1x32xf32> to vector<16x32xf32>
    %229 = arith.mulf %228, %225 : vector<16x32xf32>
    %230 = arith.select %227, %225, %229 : vector<16x32xi1>, vector<16x32xf32>
    %231 = tpu.concatenate %170, %200, %230 in 0 : vector<16x32xf32>, vector<16x32xf32>, vector<16x32xf32> -> vector<48x32xf32>
    %c192 = arith.constant 192 : index
    %c0_52 = arith.constant 0 : index
    %232 = vector.load %arg0[%c192, %c0_52] : memref<416x128xbf16, #tpu.memory_space<vmem>>, vector<32x32xbf16>
    %233 = arith.truncf %231 : vector<48x32xf32> to vector<48x32xbf16>
    %cst_53 = arith.constant dense<0.000000e+00> : vector<48x32xf32>
    %234 = tpu.matmul %233, %232, %cst_53 {dimension_numbers = #tpu.dot_dimension_numbers<[1], [0], [0], [1], [0, 0, 1, 1], [], []>} : vector<48x32xbf16>, vector<32x32xbf16>, vector<48x32xf32> -> vector<48x32xf32>
    %235 = vector.extract_strided_slice %0 {offsets = [16, 0], sizes = [1, 32], strides = [1, 1]} : vector<32x128xf32> to vector<1x32xf32>
    %236 = vector.broadcast %235 : vector<1x32xf32> to vector<48x32xf32>
    %237 = arith.addf %234, %236 : vector<48x32xf32>
    %238 = vector.extract_strided_slice %0 {offsets = [17, 0], sizes = [1, 32], strides = [1, 1]} : vector<32x128xf32> to vector<1x32xf32>
    %239 = vector.extract_strided_slice %0 {offsets = [18, 0], sizes = [1, 32], strides = [1, 1]} : vector<32x128xf32> to vector<1x32xf32>
    %240 = vector.extract_strided_slice %237 {offsets = [0, 0], sizes = [16, 32], strides = [1, 1]} : vector<48x32xf32> to vector<16x32xf32>
    %cst_54 = arith.constant dense<0.000000e+00> : vector<32xf32>
    %241 = vector.multi_reduction <add>, %240, %cst_54 [0] : vector<16x32xf32> to vector<32xf32>
    %242 = vector.shape_cast %241 : vector<32xf32> to vector<1x32xf32>
    %cst_55 = arith.constant 1.600000e+01 : f32
    %243 = vector.broadcast %cst_55 : f32 to vector<1x32xf32>
    %244 = arith.divf %242, %243 : vector<1x32xf32>
    %245 = vector.broadcast %244 : vector<1x32xf32> to vector<16x32xf32>
    %246 = arith.subf %240, %245 : vector<16x32xf32>
    %247 = arith.mulf %246, %246 : vector<16x32xf32>
    %cst_56 = arith.constant dense<0.000000e+00> : vector<32xf32>
    %248 = vector.multi_reduction <add>, %247, %cst_56 [0] : vector<16x32xf32> to vector<32xf32>
    %249 = vector.shape_cast %248 : vector<32xf32> to vector<1x32xf32>
    %cst_57 = arith.constant 1.600000e+01 : f32
    %250 = vector.broadcast %cst_57 : f32 to vector<1x32xf32>
    %251 = arith.divf %249, %250 : vector<1x32xf32>
    %252 = vector.broadcast %244 : vector<1x32xf32> to vector<16x32xf32>
    %253 = arith.subf %240, %252 : vector<16x32xf32>
    %cst_58 = arith.constant 9.99999974E-6 : f32
    %254 = vector.broadcast %cst_58 : f32 to vector<1x32xf32>
    %255 = arith.addf %251, %254 : vector<1x32xf32>
    %256 = math.rsqrt %255 : vector<1x32xf32>
    %257 = vector.broadcast %256 : vector<1x32xf32> to vector<16x32xf32>
    %258 = arith.mulf %253, %257 : vector<16x32xf32>
    %259 = vector.broadcast %238 : vector<1x32xf32> to vector<16x32xf32>
    %260 = arith.mulf %258, %259 : vector<16x32xf32>
    %261 = vector.broadcast %239 : vector<1x32xf32> to vector<16x32xf32>
    %262 = arith.addf %260, %261 : vector<16x32xf32>
    %cst_59 = arith.constant 0.000000e+00 : f32
    %263 = vector.broadcast %cst_59 : f32 to vector<16x32xf32>
    %264 = arith.maximumf %262, %263 : vector<16x32xf32>
    %265 = vector.extract_strided_slice %237 {offsets = [16, 0], sizes = [16, 32], strides = [1, 1]} : vector<48x32xf32> to vector<16x32xf32>
    %cst_60 = arith.constant dense<0.000000e+00> : vector<32xf32>
    %266 = vector.multi_reduction <add>, %265, %cst_60 [0] : vector<16x32xf32> to vector<32xf32>
    %267 = vector.shape_cast %266 : vector<32xf32> to vector<1x32xf32>
    %cst_61 = arith.constant 1.600000e+01 : f32
    %268 = vector.broadcast %cst_61 : f32 to vector<1x32xf32>
    %269 = arith.divf %267, %268 : vector<1x32xf32>
    %270 = vector.broadcast %269 : vector<1x32xf32> to vector<16x32xf32>
    %271 = arith.subf %265, %270 : vector<16x32xf32>
    %272 = arith.mulf %271, %271 : vector<16x32xf32>
    %cst_62 = arith.constant dense<0.000000e+00> : vector<32xf32>
    %273 = vector.multi_reduction <add>, %272, %cst_62 [0] : vector<16x32xf32> to vector<32xf32>
    %274 = vector.shape_cast %273 : vector<32xf32> to vector<1x32xf32>
    %cst_63 = arith.constant 1.600000e+01 : f32
    %275 = vector.broadcast %cst_63 : f32 to vector<1x32xf32>
    %276 = arith.divf %274, %275 : vector<1x32xf32>
    %277 = vector.broadcast %269 : vector<1x32xf32> to vector<16x32xf32>
    %278 = arith.subf %265, %277 : vector<16x32xf32>
    %cst_64 = arith.constant 9.99999974E-6 : f32
    %279 = vector.broadcast %cst_64 : f32 to vector<1x32xf32>
    %280 = arith.addf %276, %279 : vector<1x32xf32>
    %281 = math.rsqrt %280 : vector<1x32xf32>
    %282 = vector.broadcast %281 : vector<1x32xf32> to vector<16x32xf32>
    %283 = arith.mulf %278, %282 : vector<16x32xf32>
    %284 = vector.broadcast %238 : vector<1x32xf32> to vector<16x32xf32>
    %285 = arith.mulf %283, %284 : vector<16x32xf32>
    %286 = vector.broadcast %239 : vector<1x32xf32> to vector<16x32xf32>
    %287 = arith.addf %285, %286 : vector<16x32xf32>
    %cst_65 = arith.constant 0.000000e+00 : f32
    %288 = vector.broadcast %cst_65 : f32 to vector<16x32xf32>
    %289 = arith.maximumf %287, %288 : vector<16x32xf32>
    %290 = vector.extract_strided_slice %237 {offsets = [32, 0], sizes = [16, 32], strides = [1, 1]} : vector<48x32xf32> to vector<16x32xf32>
    %cst_66 = arith.constant dense<0.000000e+00> : vector<32xf32>
    %291 = vector.multi_reduction <add>, %290, %cst_66 [0] : vector<16x32xf32> to vector<32xf32>
    %292 = vector.shape_cast %291 : vector<32xf32> to vector<1x32xf32>
    %cst_67 = arith.constant 1.600000e+01 : f32
    %293 = vector.broadcast %cst_67 : f32 to vector<1x32xf32>
    %294 = arith.divf %292, %293 : vector<1x32xf32>
    %295 = vector.broadcast %294 : vector<1x32xf32> to vector<16x32xf32>
    %296 = arith.subf %290, %295 : vector<16x32xf32>
    %297 = arith.mulf %296, %296 : vector<16x32xf32>
    %cst_68 = arith.constant dense<0.000000e+00> : vector<32xf32>
    %298 = vector.multi_reduction <add>, %297, %cst_68 [0] : vector<16x32xf32> to vector<32xf32>
    %299 = vector.shape_cast %298 : vector<32xf32> to vector<1x32xf32>
    %cst_69 = arith.constant 1.600000e+01 : f32
    %300 = vector.broadcast %cst_69 : f32 to vector<1x32xf32>
    %301 = arith.divf %299, %300 : vector<1x32xf32>
    %302 = vector.broadcast %294 : vector<1x32xf32> to vector<16x32xf32>
    %303 = arith.subf %290, %302 : vector<16x32xf32>
    %cst_70 = arith.constant 9.99999974E-6 : f32
    %304 = vector.broadcast %cst_70 : f32 to vector<1x32xf32>
    %305 = arith.addf %301, %304 : vector<1x32xf32>
    %306 = math.rsqrt %305 : vector<1x32xf32>
    %307 = vector.broadcast %306 : vector<1x32xf32> to vector<16x32xf32>
    %308 = arith.mulf %303, %307 : vector<16x32xf32>
    %309 = vector.broadcast %238 : vector<1x32xf32> to vector<16x32xf32>
    %310 = arith.mulf %308, %309 : vector<16x32xf32>
    %311 = vector.broadcast %239 : vector<1x32xf32> to vector<16x32xf32>
    %312 = arith.addf %310, %311 : vector<16x32xf32>
    %cst_71 = arith.constant 0.000000e+00 : f32
    %313 = vector.broadcast %cst_71 : f32 to vector<16x32xf32>
    %314 = arith.maximumf %312, %313 : vector<16x32xf32>
    %315 = tpu.concatenate %264, %289, %314 in 0 : vector<16x32xf32>, vector<16x32xf32>, vector<16x32xf32> -> vector<48x32xf32>
    %316 = vector.extract_strided_slice %0 {offsets = [19, 0], sizes = [1, 32], strides = [1, 1]} : vector<32x128xf32> to vector<1x32xf32>
    %317 = vector.broadcast %316 : vector<1x32xf32> to vector<48x32xf32>
    %318 = arith.mulf %315, %317 : vector<48x32xf32>
    %cst_72 = arith.constant dense<0.000000e+00> : vector<48xf32>
    %319 = vector.multi_reduction <add>, %318, %cst_72 [1] : vector<48x32xf32> to vector<48xf32>
    %320 = vector.shape_cast %319 : vector<48xf32> to vector<48x1xf32>
    %321 = vector.extract_strided_slice %0 {offsets = [20, 0], sizes = [1, 1], strides = [1, 1]} : vector<32x128xf32> to vector<1x1xf32>
    %322 = vector.broadcast %321 : vector<1x1xf32> to vector<48x1xf32>
    %323 = arith.addf %320, %322 : vector<48x1xf32>
    %c0_73 = arith.constant 0 : index
    %c0_74 = arith.constant 0 : index
    %324 = vector.load %arg4[%c0_73, %c0_74] : memref<16x4xf32, #tpu.memory_space<vmem>>, vector<16x4xf32>
    %cst_75 = arith.constant 0.000000e+00 : f32
    %325 = vector.broadcast %cst_75 : f32 to vector<16x4xf32>
    %326 = tpu.concatenate %324, %325, %325 in 1 : vector<16x4xf32>, vector<16x4xf32>, vector<16x4xf32> -> vector<16x12xf32>
    %327 = tpu.concatenate %325, %324, %325 in 1 : vector<16x4xf32>, vector<16x4xf32>, vector<16x4xf32> -> vector<16x12xf32>
    %328 = tpu.concatenate %325, %325, %324 in 1 : vector<16x4xf32>, vector<16x4xf32>, vector<16x4xf32> -> vector<16x12xf32>
    %329 = tpu.concatenate %326, %327, %328 in 0 : vector<16x12xf32>, vector<16x12xf32>, vector<16x12xf32> -> vector<48x12xf32>
    %cst_76 = arith.constant 0.000000e+00 : f32
    %330 = vector.broadcast %cst_76 : f32 to vector<48x12xf32>
    %331 = arith.cmpf ogt, %329, %330 : vector<48x12xf32>
    %cst_77 = arith.constant -1.000000e+30 : f32
    %332 = vector.shape_cast %323 : vector<48x1xf32> to vector<48x1xf32>
    %333 = vector.broadcast %332 : vector<48x1xf32> to vector<48x12xf32>
    %334 = vector.broadcast %cst_77 : f32 to vector<48x12xf32>
    %335 = arith.select %331, %333, %334 : vector<48x12xi1>, vector<48x12xf32>
    %cst_78 = arith.constant dense<0xFF800000> : vector<12xf32>
    %336 = vector.multi_reduction <maximumf>, %335, %cst_78 [0] : vector<48x12xf32> to vector<12xf32>
    %337 = vector.shape_cast %336 : vector<12xf32> to vector<1x12xf32>
    %338 = vector.broadcast %337 : vector<1x12xf32> to vector<48x12xf32>
    %339 = arith.subf %335, %338 : vector<48x12xf32>
    %340 = math.exp %339 : vector<48x12xf32>
    %341 = arith.mulf %340, %329 : vector<48x12xf32>
    %cst_79 = arith.constant dense<0.000000e+00> : vector<12xf32>
    %342 = vector.multi_reduction <add>, %341, %cst_79 [0] : vector<48x12xf32> to vector<12xf32>
    %343 = vector.shape_cast %342 : vector<12xf32> to vector<1x12xf32>
    %cst_80 = arith.constant 1.000000e-30 : f32
    %344 = vector.broadcast %cst_80 : f32 to vector<1x12xf32>
    %345 = arith.maximumf %343, %344 : vector<1x12xf32>
    %346 = tpu.reciprocal %345 {approx = true} : vector<1x12xf32> -> vector<1x12xf32>
    %347 = vector.broadcast %346 : vector<1x12xf32> to vector<48x12xf32>
    %348 = arith.mulf %341, %347 : vector<48x12xf32>
    %349 = arith.truncf %348 : vector<48x12xf32> to vector<48x12xbf16>
    %350 = arith.truncf %231 : vector<48x32xf32> to vector<48x32xbf16>
    %cst_81 = arith.constant dense<0.000000e+00> : vector<12x32xf32>
    %351 = tpu.matmul %349, %350, %cst_81 {dimension_numbers = #tpu.dot_dimension_numbers<[0], [0], [1], [1], [0, 1, 1, 1], [], []>} : vector<48x12xbf16>, vector<48x32xbf16>, vector<12x32xf32> -> vector<12x32xf32>
    %352 = vector.extract_strided_slice %351 {offsets = [0, 0], sizes = [4, 32], strides = [1, 1]} : vector<12x32xf32> to vector<4x32xf32>
    %353 = vector.extract_strided_slice %0 {offsets = [21, 0], sizes = [1, 64], strides = [1, 1]} : vector<32x128xf32> to vector<1x64xf32>
    %354 = vector.extract_strided_slice %0 {offsets = [22, 0], sizes = [1, 64], strides = [1, 1]} : vector<32x128xf32> to vector<1x64xf32>
    %355 = vector.extract_strided_slice %0 {offsets = [23, 0], sizes = [1, 64], strides = [1, 1]} : vector<32x128xf32> to vector<1x64xf32>
    %356 = vector.extract_strided_slice %0 {offsets = [24, 0], sizes = [1, 64], strides = [1, 1]} : vector<32x128xf32> to vector<1x64xf32>
    %357 = vector.extract_strided_slice %0 {offsets = [25, 0], sizes = [1, 32], strides = [1, 1]} : vector<32x128xf32> to vector<1x32xf32>
    %c224 = arith.constant 224 : index
    %c0_82 = arith.constant 0 : index
    %358 = vector.load %arg0[%c224, %c0_82] : memref<416x128xbf16, #tpu.memory_space<vmem>>, vector<32x64xbf16>
    %359 = arith.truncf %352 : vector<4x32xf32> to vector<4x32xbf16>
    %cst_83 = arith.constant dense<0.000000e+00> : vector<4x64xf32>
    %360 = tpu.matmul %359, %358, %cst_83 {dimension_numbers = #tpu.dot_dimension_numbers<[1], [0], [0], [1], [0, 0, 1, 1], [], []>} : vector<4x32xbf16>, vector<32x64xbf16>, vector<4x64xf32> -> vector<4x64xf32>
    %361 = vector.broadcast %353 : vector<1x64xf32> to vector<4x64xf32>
    %362 = arith.addf %360, %361 : vector<4x64xf32>
    %cst_84 = arith.constant dense<0.000000e+00> : vector<64xf32>
    %363 = vector.multi_reduction <add>, %362, %cst_84 [0] : vector<4x64xf32> to vector<64xf32>
    %364 = vector.shape_cast %363 : vector<64xf32> to vector<1x64xf32>
    %cst_85 = arith.constant 4.000000e+00 : f32
    %365 = vector.broadcast %cst_85 : f32 to vector<1x64xf32>
    %366 = arith.divf %364, %365 : vector<1x64xf32>
    %367 = vector.broadcast %366 : vector<1x64xf32> to vector<4x64xf32>
    %368 = arith.subf %362, %367 : vector<4x64xf32>
    %369 = arith.mulf %368, %368 : vector<4x64xf32>
    %cst_86 = arith.constant dense<0.000000e+00> : vector<64xf32>
    %370 = vector.multi_reduction <add>, %369, %cst_86 [0] : vector<4x64xf32> to vector<64xf32>
    %371 = vector.shape_cast %370 : vector<64xf32> to vector<1x64xf32>
    %cst_87 = arith.constant 4.000000e+00 : f32
    %372 = vector.broadcast %cst_87 : f32 to vector<1x64xf32>
    %373 = arith.divf %371, %372 : vector<1x64xf32>
    %374 = vector.broadcast %366 : vector<1x64xf32> to vector<4x64xf32>
    %375 = arith.subf %362, %374 : vector<4x64xf32>
    %cst_88 = arith.constant 9.99999974E-6 : f32
    %376 = vector.broadcast %cst_88 : f32 to vector<1x64xf32>
    %377 = arith.addf %373, %376 : vector<1x64xf32>
    %378 = math.rsqrt %377 : vector<1x64xf32>
    %379 = vector.broadcast %378 : vector<1x64xf32> to vector<4x64xf32>
    %380 = arith.mulf %375, %379 : vector<4x64xf32>
    %381 = vector.broadcast %354 : vector<1x64xf32> to vector<4x64xf32>
    %382 = arith.mulf %380, %381 : vector<4x64xf32>
    %383 = vector.broadcast %355 : vector<1x64xf32> to vector<4x64xf32>
    %384 = arith.addf %382, %383 : vector<4x64xf32>
    %cst_89 = arith.constant 0.000000e+00 : f32
    %385 = vector.broadcast %cst_89 : f32 to vector<4x64xf32>
    %386 = arith.cmpf ogt, %384, %385 : vector<4x64xf32>
    %387 = vector.broadcast %356 : vector<1x64xf32> to vector<4x64xf32>
    %388 = arith.mulf %387, %384 : vector<4x64xf32>
    %389 = arith.select %386, %384, %388 : vector<4x64xi1>, vector<4x64xf32>
    %c256 = arith.constant 256 : index
    %c0_90 = arith.constant 0 : index
    %390 = vector.load %arg0[%c256, %c0_90] : memref<416x128xbf16, #tpu.memory_space<vmem>>, vector<64x32xbf16>
    %391 = arith.truncf %389 : vector<4x64xf32> to vector<4x64xbf16>
    %cst_91 = arith.constant dense<0.000000e+00> : vector<4x32xf32>
    %392 = tpu.matmul %391, %390, %cst_91 {dimension_numbers = #tpu.dot_dimension_numbers<[1], [0], [0], [1], [0, 0, 1, 1], [], []>} : vector<4x64xbf16>, vector<64x32xbf16>, vector<4x32xf32> -> vector<4x32xf32>
    %393 = vector.broadcast %357 : vector<1x32xf32> to vector<4x32xf32>
    %394 = arith.addf %392, %393 : vector<4x32xf32>
    %395 = vector.extract_strided_slice %351 {offsets = [8, 0], sizes = [4, 32], strides = [1, 1]} : vector<12x32xf32> to vector<4x32xf32>
    %396 = vector.extract_strided_slice %0 {offsets = [26, 0], sizes = [1, 64], strides = [1, 1]} : vector<32x128xf32> to vector<1x64xf32>
    %397 = vector.extract_strided_slice %0 {offsets = [27, 0], sizes = [1, 64], strides = [1, 1]} : vector<32x128xf32> to vector<1x64xf32>
    %398 = vector.extract_strided_slice %0 {offsets = [28, 0], sizes = [1, 64], strides = [1, 1]} : vector<32x128xf32> to vector<1x64xf32>
    %399 = vector.extract_strided_slice %0 {offsets = [29, 0], sizes = [1, 64], strides = [1, 1]} : vector<32x128xf32> to vector<1x64xf32>
    %400 = vector.extract_strided_slice %0 {offsets = [30, 0], sizes = [1, 32], strides = [1, 1]} : vector<32x128xf32> to vector<1x32xf32>
    %c320 = arith.constant 320 : index
    %c0_92 = arith.constant 0 : index
    %401 = vector.load %arg0[%c320, %c0_92] : memref<416x128xbf16, #tpu.memory_space<vmem>>, vector<32x64xbf16>
    %402 = arith.truncf %395 : vector<4x32xf32> to vector<4x32xbf16>
    %cst_93 = arith.constant dense<0.000000e+00> : vector<4x64xf32>
    %403 = tpu.matmul %402, %401, %cst_93 {dimension_numbers = #tpu.dot_dimension_numbers<[1], [0], [0], [1], [0, 0, 1, 1], [], []>} : vector<4x32xbf16>, vector<32x64xbf16>, vector<4x64xf32> -> vector<4x64xf32>
    %404 = vector.broadcast %396 : vector<1x64xf32> to vector<4x64xf32>
    %405 = arith.addf %403, %404 : vector<4x64xf32>
    %cst_94 = arith.constant dense<0.000000e+00> : vector<64xf32>
    %406 = vector.multi_reduction <add>, %405, %cst_94 [0] : vector<4x64xf32> to vector<64xf32>
    %407 = vector.shape_cast %406 : vector<64xf32> to vector<1x64xf32>
    %cst_95 = arith.constant 4.000000e+00 : f32
    %408 = vector.broadcast %cst_95 : f32 to vector<1x64xf32>
    %409 = arith.divf %407, %408 : vector<1x64xf32>
    %410 = vector.broadcast %409 : vector<1x64xf32> to vector<4x64xf32>
    %411 = arith.subf %405, %410 : vector<4x64xf32>
    %412 = arith.mulf %411, %411 : vector<4x64xf32>
    %cst_96 = arith.constant dense<0.000000e+00> : vector<64xf32>
    %413 = vector.multi_reduction <add>, %412, %cst_96 [0] : vector<4x64xf32> to vector<64xf32>
    %414 = vector.shape_cast %413 : vector<64xf32> to vector<1x64xf32>
    %cst_97 = arith.constant 4.000000e+00 : f32
    %415 = vector.broadcast %cst_97 : f32 to vector<1x64xf32>
    %416 = arith.divf %414, %415 : vector<1x64xf32>
    %417 = vector.broadcast %409 : vector<1x64xf32> to vector<4x64xf32>
    %418 = arith.subf %405, %417 : vector<4x64xf32>
    %cst_98 = arith.constant 9.99999974E-6 : f32
    %419 = vector.broadcast %cst_98 : f32 to vector<1x64xf32>
    %420 = arith.addf %416, %419 : vector<1x64xf32>
    %421 = math.rsqrt %420 : vector<1x64xf32>
    %422 = vector.broadcast %421 : vector<1x64xf32> to vector<4x64xf32>
    %423 = arith.mulf %418, %422 : vector<4x64xf32>
    %424 = vector.broadcast %397 : vector<1x64xf32> to vector<4x64xf32>
    %425 = arith.mulf %423, %424 : vector<4x64xf32>
    %426 = vector.broadcast %398 : vector<1x64xf32> to vector<4x64xf32>
    %427 = arith.addf %425, %426 : vector<4x64xf32>
    %cst_99 = arith.constant 0.000000e+00 : f32
    %428 = vector.broadcast %cst_99 : f32 to vector<4x64xf32>
    %429 = arith.cmpf ogt, %427, %428 : vector<4x64xf32>
    %430 = vector.broadcast %399 : vector<1x64xf32> to vector<4x64xf32>
    %431 = arith.mulf %430, %427 : vector<4x64xf32>
    %432 = arith.select %429, %427, %431 : vector<4x64xi1>, vector<4x64xf32>
    %c352 = arith.constant 352 : index
    %c0_100 = arith.constant 0 : index
    %433 = vector.load %arg0[%c352, %c0_100] : memref<416x128xbf16, #tpu.memory_space<vmem>>, vector<64x32xbf16>
    %434 = arith.truncf %432 : vector<4x64xf32> to vector<4x64xbf16>
    %cst_101 = arith.constant dense<0.000000e+00> : vector<4x32xf32>
    %435 = tpu.matmul %434, %433, %cst_101 {dimension_numbers = #tpu.dot_dimension_numbers<[1], [0], [0], [1], [0, 0, 1, 1], [], []>} : vector<4x64xbf16>, vector<64x32xbf16>, vector<4x32xf32> -> vector<4x32xf32>
    %436 = vector.broadcast %400 : vector<1x32xf32> to vector<4x32xf32>
    %437 = arith.addf %435, %436 : vector<4x32xf32>
    %438 = vector.extract_strided_slice %351 {offsets = [4, 0], sizes = [4, 32], strides = [1, 1]} : vector<12x32xf32> to vector<4x32xf32>
    %439 = arith.mulf %394, %394 : vector<4x32xf32>
    %cst_102 = arith.constant dense<0.000000e+00> : vector<4xf32>
    %440 = vector.multi_reduction <add>, %439, %cst_102 [1] : vector<4x32xf32> to vector<4xf32>
    %441 = vector.shape_cast %440 : vector<4xf32> to vector<4x1xf32>
    %cst_103 = arith.constant 1.000000e-24 : f32
    %442 = vector.broadcast %cst_103 : f32 to vector<4x1xf32>
    %443 = arith.maximumf %441, %442 : vector<4x1xf32>
    %444 = math.rsqrt %443 : vector<4x1xf32>
    %445 = vector.broadcast %444 : vector<4x1xf32> to vector<4x32xf32>
    %446 = arith.mulf %394, %445 : vector<4x32xf32>
    %447 = arith.mulf %437, %437 : vector<4x32xf32>
    %cst_104 = arith.constant dense<0.000000e+00> : vector<4xf32>
    %448 = vector.multi_reduction <add>, %447, %cst_104 [1] : vector<4x32xf32> to vector<4xf32>
    %449 = vector.shape_cast %448 : vector<4xf32> to vector<4x1xf32>
    %cst_105 = arith.constant 1.000000e-24 : f32
    %450 = vector.broadcast %cst_105 : f32 to vector<4x1xf32>
    %451 = arith.maximumf %449, %450 : vector<4x1xf32>
    %452 = math.rsqrt %451 : vector<4x1xf32>
    %453 = vector.broadcast %452 : vector<4x1xf32> to vector<4x32xf32>
    %454 = arith.mulf %437, %453 : vector<4x32xf32>
    %455 = arith.mulf %446, %454 : vector<4x32xf32>
    %cst_106 = arith.constant dense<0.000000e+00> : vector<4xf32>
    %456 = vector.multi_reduction <add>, %455, %cst_106 [1] : vector<4x32xf32> to vector<4xf32>
    %457 = vector.shape_cast %456 : vector<4xf32> to vector<4x1xf32>
    %cst_107 = arith.constant 2.000000e+00 : f32
    %458 = vector.broadcast %cst_107 : f32 to vector<4x1xf32>
    %459 = arith.mulf %458, %457 : vector<4x1xf32>
    %cst_108 = arith.constant 2.000000e+00 : f32
    %460 = vector.broadcast %cst_108 : f32 to vector<4x1xf32>
    %461 = arith.subf %460, %459 : vector<4x1xf32>
    %cst_109 = arith.constant dense<0.000000e+00> : vector<1xf32>
    %462 = vector.multi_reduction <add>, %461, %cst_109 [0] : vector<4x1xf32> to vector<1xf32>
    %463 = vector.shape_cast %462 : vector<1xf32> to vector<1x1xf32>
    %cst_110 = arith.constant 4.000000e+00 : f32
    %464 = vector.broadcast %cst_110 : f32 to vector<1x1xf32>
    %465 = arith.divf %463, %464 : vector<1x1xf32>
    %cst_111 = arith.constant 0.000000e+00 : f32
    %466 = vector.broadcast %cst_111 : f32 to vector<4x96xf32>
    %467 = tpu.concatenate %438, %466 in 1 : vector<4x32xf32>, vector<4x96xf32> -> vector<4x128xf32>
    %468 = vector.shape_cast %465 : vector<1x1xf32> to vector<1x1xf32>
    %469 = vector.broadcast %468 : vector<1x1xf32> to vector<1x128xf32>
    %cst_112 = arith.constant 0.000000e+00 : f32
    %470 = vector.broadcast %cst_112 : f32 to vector<3x128xf32>
    %471 = tpu.concatenate %467, %469, %470 in 0 : vector<4x128xf32>, vector<1x128xf32>, vector<3x128xf32> -> vector<8x128xf32>
    %c0_113 = arith.constant 0 : index
    %c0_114 = arith.constant 0 : index
    %472 = vector.load %arg5[%c0_113, %c0_114] : memref<8x128xf32, #tpu.memory_space<vmem>>, vector<8x128xf32>
    tpu.vector_store %arg5[%c0_113, %c0_114], %471 {strides = array<i32>} : memref<8x128xf32, #tpu.memory_space<vmem>>, vector<8x128xf32>,
    return
  }
}

</mosaic_0001>

<llo_original>
// kernel: forward.1
$region0: #{forward.1}
  #allocation0 [shape = 'u32[]', space=smem, size = 0x4, offset = 0x4, fixed_abs, tag = 'smem constant byte address 0x4 - core index']
  #allocation1 [shape = 'u32[144,128]{1,0:T(1,128)}', space=vmem, size = 0x12000, scoped, tag = 'internal scratch']
  %s0 = inlined_call_operand.vmem [shape: bf16[416,128], index: 0, kind: input, shape index: {}]
  %s1 = inlined_call_operand.hbm [shape: f32[32,128], index: 1, kind: input, shape index: {}]
  %s2 = inlined_call_operand.vmem [shape: f32[48,16], index: 2, kind: input, shape index: {}]
  %s3 = inlined_call_operand.vmem [shape: f32[48,32], index: 3, kind: input, shape index: {}]
  %s4 = inlined_call_operand.vmem [shape: f32[16,4], index: 4, kind: input, shape index: {}]
  %s5 = inlined_call_operand.vmem [shape: f32[8,128], index: 5, kind: output, shape index: {}]
  %s6 = sld [smem:[#allocation0]]
  $region34: #{forward.1} parent=0
    _
  %s8 = ssub.s32 1, %s6
  %s9 = scalar_select 0, %s8, %s6
  $region1: #{forward.1} parent=0
    #allocation2 [shape = 'u8[16384]{0}', space=vmem, size = 0x4000, scoped, tag = 'input window, operand 1, single buffered']
    #allocation3 [shape = 's32[1]{0}', space=sflag, size = 0x4, scoped, tag = 'scoped memory for forward.1']
    %10 = vsyncpa [#allocation3], 0
    // Predicated region
    $region2: #{forward.1} parent=1 // pred_check
      _
    $region3: #{forward.1} parent=1 // pred_check_branch
      %12 = sbr.rel (0) target = $region5
    $region4: #{forward.1} parent=1 // pred_region
      _
    $region5: #{forward.1} parent=1 // pred_fallthru
      _
    // Predicated region
    $region6: #{forward.1} parent=1 // pred_check
      _
    $region7: #{forward.1} parent=1 // pred_check_branch
      %14 = sbr.rel (0) target = $region9
    $region8: #{forward.1} parent=1 // pred_region
      %s16 = ssub.s32 512, 512
      %17 = vsyncadd [#allocation3], %s16
      %s18 = sshll.u32 [#allocation2], 4
      %s19 = int_to_ptr.vmem [resolvable:$true] %s18
      %24 = dma.hbm_to_vmem [thread:$0]  %s1, 512, %s19, [#allocation3], 128, 128, 8
    $region9: #{forward.1} parent=1 // pred_fallthru
      _
    // Predicated region
    $region10: #{forward.1} parent=1 // pred_check
      _
    $region11: #{forward.1} parent=1 // pred_check_branch
      %26 = sbr.rel (0) target = $region13
    $region12: #{forward.1} parent=1 // pred_region
      _
    $region13: #{forward.1} parent=1 // pred_fallthru
      _
    // Predicated region
    $region14: #{forward.1} parent=1 // pred_check
      _
    $region15: #{forward.1} parent=1 // pred_check_branch
      %28 = sbr.rel (0) target = $region17
    $region16: #{forward.1} parent=1 // pred_region
      _
    $region17: #{forward.1} parent=1 // pred_fallthru
      _
    // Predicated region
    $region18: #{forward.1} parent=1 // pred_check
      _
    $region19: #{forward.1} parent=1 // pred_check_branch
      %30 = sbr.rel (0) target = $region21
    $region20: #{forward.1} parent=1 // pred_region
      _
    $region21: #{forward.1} parent=1 // pred_fallthru
      _
    // Predicated region
    $region22: #{forward.1} parent=1 // pred_check
      _
    $region23: #{forward.1} parent=1 // pred_check_branch
      %32 = sbr.rel (0) target = $region25
    $region24: #{forward.1} parent=1 // pred_region
      %33 = dma.done [#allocation3], 512
    $region25: #{forward.1} parent=1 // pred_fallthru
      _
    %v35 = vld [vmem:[#allocation2] sm:$0xff]
    %v36 = vld [vmem:[#allocation2 + $0x8] sm:$0xff]
    %v37 = vld [vmem:[#allocation2 + $0x10] sm:$0xff]
    %v38 = vld [vmem:[#allocation2 + $0x18] sm:$0xff]
    %v39 = vld [vmem:[%s2] sm:$0xff]
    %v40 = vld [vmem:[%s2 + $0x8] sm:$0xff]
    %v41 = vld [vmem:[%s2 + $0x10] sm:$0xff]
    %v42 = vld [vmem:[%s2 + $0x18] sm:$0xff]
    %v43 = vld [vmem:[%s2 + $0x20] sm:$0xff]
    %v44 = vld [vmem:[%s2 + $0x28] sm:$0xff]
    %vm45 = vcmask 130048
    %v46 = vsel %vm45, %v39, 0.0
    %v47 = vsel %vm45, %v40, 0.0
    %vm48 = vcmask 261120
    %v49 = vsel %vm48, %v46, 0.0
    %v50 = vsel %vm48, %v47, 0.0
    %53 = vrot.lane.b32.xlu0 %v41, 16
    %v54 = vpop.permute.xlu0 %53
    %55 = vrot.lane.b32.xlu0 %v42, 16
    %v56 = vpop.permute.xlu0 %55
    %v59 = vsel %vm45, 0.0, %v54
    %v60 = vsel %vm45, 0.0, %v56
    %v61 = vsel %vm48, %v59, 0.0
    %v62 = vsel %vm48, %v60, 0.0
    %65 = vrot.lane.b32.xlu0 %v43, 32
    %v66 = vpop.permute.xlu0 %65
    %67 = vrot.lane.b32.xlu0 %v44, 32
    %v68 = vpop.permute.xlu0 %67
    %v71 = vsel %vm48, 0.0, %v66
    %v72 = vsel %vm48, 0.0, %v68
    %v73 = vpack.c.bf16 %v50, %v49
    %v74 = vpack.c.bf16 %v62, %v61
    %v75 = vpack.c.bf16 %v72, %v71
    %v76 = vld [vmem:[%s3] sm:$0xff]
    %v77 = vld [vmem:[%s3 + $0x8] sm:$0xff]
    %v78 = vld [vmem:[%s3 + $0x10] sm:$0xff]
    %v79 = vld [vmem:[%s3 + $0x18] sm:$0xff]
    %v80 = vld [vmem:[%s3 + $0x20] sm:$0xff]
    %v81 = vld [vmem:[%s3 + $0x28] sm:$0xff]
    %v82 = vld [vmem:[%s0] sm:$0xf]
    %v83 = vld [vmem:[%s0 + $0x4] sm:$0xf]
    %v84 = vld [vmem:[%s0 + $0x8] sm:$0xf]
    %v85 = vld [vmem:[%s0 + $0xc] sm:$0xf]
    %v86 = vpack.c.bf16 %v77, %v76
    %v87 = vpack.c.bf16 %v79, %v78
    %v92 = vunpack.c.l.b16 %v82
    %v93 = vunpack.c.l.b16 %v83
    %v94 = vunpack.c.l.b16 %v84
    %v95 = vunpack.c.l.b16 %v85
    %v96 = vpack.c.b16 %v93, %v92
    %v97 = vpack.c.b16 %v95, %v94
    %v101 = vsel %vm48, %v86, 0
    %v104 = vsel %vm48, %v87, 0
    %106 = vmatprep.subr.bf16.mxu0 0
    %107 = vmatpush1.bf16.msra.mxu0 %v96
    %108 = vmatprep.subr.bf16.mxu0 0
    %109 = vmatpush1.bf16.msra.mxu0 %v97
    %110 = vmatprep.subr.bf16.mxu0 0
    %111 = vmatpush1.bf16.msra.mxu0 0
    %112 = vmatprep.subr.bf16.mxu0 0
    %113 = vmatpush1.bf16.msra.mxu0 0
    %114 = vmatprep.subr.bf16.mxu0 0
    %115 = vmatpush1.bf16.msra.mxu0 0
    %116 = vmatprep.subr.bf16.mxu0 0
    %117 = vmatpush1.bf16.msra.mxu0 0
    %118 = vmatprep.subr.bf16.mxu0 0
    %119 = vmatpush1.bf16.msra.mxu0 0
    %120 = vmatprep.subr.bf16.mxu0 0
    %121 = vmatpush1.bf16.msra.mxu0 0
    %122 = vmatprep.subr.bf16.mxu0 0
    %123 = vmatpush1.bf16.msra.mxu0 0
    %124 = vmatprep.subr.bf16.mxu0 0
    %125 = vmatpush1.bf16.msra.mxu0 0
    %126 = vmatprep.subr.bf16.mxu0 0
    %127 = vmatpush1.bf16.msra.mxu0 0
    %128 = vmatprep.subr.bf16.mxu0 0
    %129 = vmatpush1.bf16.msra.mxu0 0
    %130 = vmatprep.subr.bf16.mxu0 0
    %131 = vmatpush1.bf16.msra.mxu0 0
    %132 = vmatprep.subr.bf16.mxu0 0
    %133 = vmatpush1.bf16.msra.mxu0 0
    %134 = vmatprep.subr.bf16.mxu0 0
    %135 = vmatpush1.bf16.msra.mxu0 0
    %136 = vmatprep.subr.bf16.mxu0 0
    %137 = vmatpush1.bf16.msra.mxu0 0
    %138 = vmatprep.mubr.bf16.mxu0 0
    %139 = vmatmul.mubr.bf16.gmra.mrb[0].mxu0 %v101
    %v140 = vpop.f32.mrb[0].mxu0
    %v141 = vadd.f32 0.0, %v140
    %v142 = vpop.f32.mrb[0].mxu0
    %v143 = vpop.f32.mrb[0].mxu0
    %v144 = vadd.f32 0.0, %v143
    %v145 = vpop.f32.mrb[0].mxu0
    %146 = vmatprep.mubr.bf16.mxu0 0
    %147 = vmatmul.mubr.bf16.gmra.mrb[0].mxu0 %v104
    %v148 = vpop.f32.mrb[0].mxu0
    %v149 = vadd.f32 0.0, %v148
    %v150 = vpop.f32.mrb[0].mxu0
    %v151 = vpop.f32.mrb[0].mxu0
    %v152 = vadd.f32 0.0, %v151
    %v153 = vpop.f32.mrb[0].mxu0
    %154 = vdwg.mxu0
    %v155 = vld [vmem:[%s0 + $0x30] sm:$0xf]
    %v156 = vld [vmem:[%s0 + $0x34] sm:$0xf]
    %v157 = vld [vmem:[%s0 + $0x38] sm:$0xf]
    %v158 = vld [vmem:[%s0 + $0x3c] sm:$0xf]
    %v159 = vpack.c.bf16 %v81, %v80
    %v164 = vunpack.c.l.b16 %v155
    %v165 = vunpack.c.l.b16 %v156
    %v166 = vunpack.c.l.b16 %v157
    %v167 = vunpack.c.l.b16 %v158
    %v168 = vpack.c.b16 %v165, %v164
    %v169 = vpack.c.b16 %v167, %v166
    %v173 = vsel %vm48, %v159, 0
    %175 = vmatprep.subr.bf16.mxu0 0
    %176 = vmatpush1.bf16.msra.mxu0 %v168
    %177 = vmatprep.subr.bf16.mxu0 0
    %178 = vmatpush1.bf16.msra.mxu0 %v169
    %179 = vmatprep.subr.bf16.mxu0 0
    %180 = vmatpush1.bf16.msra.mxu0 0
    %181 = vmatprep.subr.bf16.mxu0 0
    %182 = vmatpush1.bf16.msra.mxu0 0
    %183 = vmatprep.subr.bf16.mxu0 0
    %184 = vmatpush1.bf16.msra.mxu0 0
    %185 = vmatprep.subr.bf16.mxu0 0
    %186 = vmatpush1.bf16.msra.mxu0 0
    %187 = vmatprep.subr.bf16.mxu0 0
    %188 = vmatpush1.bf16.msra.mxu0 0
    %189 = vmatprep.subr.bf16.mxu0 0
    %190 = vmatpush1.bf16.msra.mxu0 0
    %191 = vmatprep.subr.bf16.mxu0 0
    %192 = vmatpush1.bf16.msra.mxu0 0
    %193 = vmatprep.subr.bf16.mxu0 0
    %194 = vmatpush1.bf16.msra.mxu0 0
    %195 = vmatprep.subr.bf16.mxu0 0
    %196 = vmatpush1.bf16.msra.mxu0 0
    %197 = vmatprep.subr.bf16.mxu0 0
    %198 = vmatpush1.bf16.msra.mxu0 0
    %199 = vmatprep.subr.bf16.mxu0 0
    %200 = vmatpush1.bf16.msra.mxu0 0
    %201 = vmatprep.subr.bf16.mxu0 0
    %202 = vmatpush1.bf16.msra.mxu0 0
    %203 = vmatprep.subr.bf16.mxu0 0
    %204 = vmatpush1.bf16.msra.mxu0 0
    %205 = vmatprep.subr.bf16.mxu0 0
    %206 = vmatpush1.bf16.msra.mxu0 0
    %207 = vmatprep.mubr.bf16.mxu0 0
    %208 = vmatmul.mubr.bf16.gmra.mrb[0].mxu0 %v173
    %v209 = vpop.f32.mrb[0].mxu0
    %v210 = vadd.f32 0.0, %v209
    %v211 = vpop.f32.mrb[0].mxu0
    %v212 = vpop.f32.mrb[0].mxu0
    %v213 = vadd.f32 0.0, %v212
    %v214 = vpop.f32.mrb[0].mxu0
    %215 = vdwg.mxu0
    %v216 = vpack.c.bf16 %v144, %v141
    %v217 = vpack.c.bf16 %v152, %v149
    %v218 = vpack.c.bf16 %v213, %v210
    %vm219 = vcmask 392192
    %v221 = vsel %vm219, %v73, 0
    %v224 = vsel %vm219, %v74, 0
    %v227 = vsel %vm219, %v75, 0
    %229 = vmatprep.subr.bf16.mxu0 0
    %230 = vmatpush1.bf16.msra.mxu0 %v216
    %231 = vmatprep.subr.bf16.mxu0 0
    %232 = vmatpush1.bf16.msra.mxu0 %v217
    %233 = vmatprep.subr.bf16.mxu0 0
    %234 = vmatpush1.bf16.msra.mxu0 %v218
    %235 = vmatprep.subr.bf16.mxu0 0
    %236 = vmatpush1.bf16.msra.mxu0 0
    %237 = vmatprep.subr.bf16.mxu0 0
    %238 = vmatpush1.bf16.msra.mxu0 0
    %239 = vmatprep.subr.bf16.mxu0 0
    %240 = vmatpush1.bf16.msra.mxu0 0
    %241 = vmatprep.subr.bf16.mxu0 0
    %242 = vmatpush1.bf16.msra.mxu0 0
    %243 = vmatprep.subr.bf16.mxu0 0
    %244 = vmatpush1.bf16.msra.mxu0 0
    %245 = vmatprep.subr.bf16.mxu0 0
    %246 = vmatpush1.bf16.msra.mxu0 0
    %247 = vmatprep.subr.bf16.mxu0 0
    %248 = vmatpush1.bf16.msra.mxu0 0
    %249 = vmatprep.subr.bf16.mxu0 0
    %250 = vmatpush1.bf16.msra.mxu0 0
    %251 = vmatprep.subr.bf16.mxu0 0
    %252 = vmatpush1.bf16.msra.mxu0 0
    %253 = vmatprep.subr.bf16.mxu0 0
    %254 = vmatpush1.bf16.msra.mxu0 0
    %255 = vmatprep.subr.bf16.mxu0 0
    %256 = vmatpush1.bf16.msra.mxu0 0
    %257 = vmatprep.subr.bf16.mxu0 0
    %258 = vmatpush1.bf16.msra.mxu0 0
    %259 = vmatprep.subr.bf16.mxu0 0
    %260 = vmatpush1.bf16.msra.mxu0 0
    %261 = vmatprep.mubr.bf16.mxu0 0
    %262 = vmatmul.mubr.bf16.gmra.mrb[0].mxu0 %v221
    %v263 = vpop.f32.mrb[0].mxu0
    %v264 = vadd.f32 0.0, %v263
    %v265 = vpop.f32.mrb[0].mxu0
    %v266 = vpop.f32.mrb[0].mxu0
    %v267 = vadd.f32 0.0, %v266
    %v268 = vpop.f32.mrb[0].mxu0
    %269 = vmatprep.mubr.bf16.mxu0 0
    %270 = vmatmul.mubr.bf16.gmra.mrb[0].mxu0 %v224
    %v271 = vpop.f32.mrb[0].mxu0
    %v272 = vadd.f32 0.0, %v271
    %v273 = vpop.f32.mrb[0].mxu0
    %v274 = vpop.f32.mrb[0].mxu0
    %v275 = vadd.f32 0.0, %v274
    %v276 = vpop.f32.mrb[0].mxu0
    %277 = vmatprep.mubr.bf16.mxu0 0
    %278 = vmatmul.mubr.bf16.gmra.mrb[0].mxu0 %v227
    %v279 = vpop.f32.mrb[0].mxu0
    %v280 = vadd.f32 0.0, %v279
    %v281 = vpop.f32.mrb[0].mxu0
    %v282 = vpop.f32.mrb[0].mxu0
    %v283 = vadd.f32 0.0, %v282
    %v284 = vpop.f32.mrb[0].mxu0
    %285 = vdwg.mxu0
    %v286 = vlaneseq
    %v287 = vshrl.u32 %v286, 7
    %v288 = vsub.s32 0, %v287
    %v289 = vrot.slane %v35, %v288
    %v290 = vadd.f32 %v264, %v289
    %v291 = vadd.f32 %v267, %v289
    %vm292 = vcmask 523264
    %v293 = vsel %vm292, %v290, 0.0
    %v294 = vsel %vm292, %v291, 0.0
    %v295 = vadd.f32 %v293, %v294
    %v296 = vrot.slane %v295, 4
    %v297 = vadd.f32 %v295, %v296
    %v298 = vrot.slane %v297, 2
    %v299 = vadd.f32 %v297, %v298
    %v300 = vrot.slane %v299, 1
    %v301 = vadd.f32 %v299, %v300
    %v302 = vrcp.pop 16.0
    %v303 = vmul.f32 %v301, %v302
    %v304 = vsub.f32 %v290, %v303
    %v305 = vsub.f32 %v291, %v303
    %v306 = vmul.f32 %v304, %v304
    %v307 = vmul.f32 %v305, %v305
    %v308 = vsel %vm292, %v306, 0.0
    %v309 = vsel %vm292, %v307, 0.0
    %v310 = vadd.f32 %v308, %v309
    %v311 = vrot.slane %v310, 4
    %v312 = vadd.f32 %v310, %v311
    %v313 = vrot.slane %v312, 2
    %v314 = vadd.f32 %v312, %v313
    %v315 = vrot.slane %v314, 1
    %v316 = vadd.f32 %v314, %v315
    %v317 = vmul.f32 %v316, %v302
    %v318 = vadd.f32 %v317, 1e-05
    %v319 = vrsqrt.pop %v318
    %v320 = vmul.f32 %v304, %v319
    %v321 = vmul.f32 %v305, %v319
    %v322 = vlaneseq
    %v323 = vshrl.u32 %v322, 7
    %v324 = vsub.s32 1, %v323
    %v325 = vrot.slane %v35, %v324
    %v326 = vmul.f32 %v320, %v325
    %v327 = vmul.f32 %v321, %v325
    %v328 = vlaneseq
    %v329 = vshrl.u32 %v328, 7
    %v330 = vsub.s32 2, %v329
    %v331 = vrot.slane %v35, %v330
    %v332 = vadd.f32 %v326, %v331
    %v333 = vadd.f32 %v327, %v331
    %vm334 = vcmp.gt.f32.partialorder %v332, 0.0
    %vm335 = vcmp.gt.f32.partialorder %v333, 0.0
    %v336 = vlaneseq
    %v337 = vshrl.u32 %v336, 7
    %v338 = vsub.s32 3, %v337
    %v339 = vrot.slane %v35, %v338
    %v340 = vmul.f32 %v339, %v332
    %v341 = vmul.f32 %v339, %v333
    %v342 = vsel %vm334, %v332, %v340
    %v343 = vsel %vm335, %v333, %v341
    %v344 = vadd.f32 %v272, %v289
    %v345 = vadd.f32 %v275, %v289
    %v346 = vsel %vm292, %v344, 0.0
    %v347 = vsel %vm292, %v345, 0.0
    %v348 = vadd.f32 %v346, %v347
    %v349 = vrot.slane %v348, 4
    %v350 = vadd.f32 %v348, %v349
    %v351 = vrot.slane %v350, 2
    %v352 = vadd.f32 %v350, %v351
    %v353 = vrot.slane %v352, 1
    %v354 = vadd.f32 %v352, %v353
    %v355 = vmul.f32 %v354, %v302
    %v356 = vsub.f32 %v344, %v355
    %v357 = vsub.f32 %v345, %v355
    %v358 = vmul.f32 %v356, %v356
    %v359 = vmul.f32 %v357, %v357
    %v360 = vsel %vm292, %v358, 0.0
    %v361 = vsel %vm292, %v359, 0.0
    %v362 = vadd.f32 %v360, %v361
    %v363 = vrot.slane %v362, 4
    %v364 = vadd.f32 %v362, %v363
    %v365 = vrot.slane %v364, 2
    %v366 = vadd.f32 %v364, %v365
    %v367 = vrot.slane %v366, 1
    %v368 = vadd.f32 %v366, %v367
    %v369 = vmul.f32 %v368, %v302
    %v370 = vadd.f32 %v369, 1e-05
    %v371 = vrsqrt.pop %v370
    %v372 = vmul.f32 %v356, %v371
    %v373 = vmul.f32 %v357, %v371
    %v374 = vmul.f32 %v372, %v325
    %v375 = vmul.f32 %v373, %v325
    %v376 = vadd.f32 %v374, %v331
    %v377 = vadd.f32 %v375, %v331
    %vm378 = vcmp.gt.f32.partialorder %v376, 0.0
    %vm379 = vcmp.gt.f32.partialorder %v377, 0.0
    %v380 = vmul.f32 %v339, %v376
    %v381 = vmul.f32 %v339, %v377
    %v382 = vsel %vm378, %v376, %v380
    %v383 = vsel %vm379, %v377, %v381
    %v384 = vlaneseq
    %v385 = vshrl.u32 %v384, 7
    %v386 = vsub.s32 0, %v385
    %v387 = vrot.slane %v36, %v386
    %v388 = vadd.f32 %v280, %v387
    %v389 = vadd.f32 %v283, %v387
    %v390 = vsel %vm292, %v388, 0.0
    %v391 = vsel %vm292, %v389, 0.0
    %v392 = vadd.f32 %v390, %v391
    %v393 = vrot.slane %v392, 4
    %v394 = vadd.f32 %v392, %v393
    %v395 = vrot.slane %v394, 2
    %v396 = vadd.f32 %v394, %v395
    %v397 = vrot.slane %v396, 1
    %v398 = vadd.f32 %v396, %v397
    %v399 = vmul.f32 %v398, %v302
    %v400 = vsub.f32 %v388, %v399
    %v401 = vsub.f32 %v389, %v399
    %v402 = vmul.f32 %v400, %v400
    %v403 = vmul.f32 %v401, %v401
    %v404 = vsel %vm292, %v402, 0.0
    %v405 = vsel %vm292, %v403, 0.0
    %v406 = vadd.f32 %v404, %v405
    %v407 = vrot.slane %v406, 4
    %v408 = vadd.f32 %v406, %v407
    %v409 = vrot.slane %v408, 2
    %v410 = vadd.f32 %v408, %v409
    %v411 = vrot.slane %v410, 1
    %v412 = vadd.f32 %v410, %v411
    %v413 = vmul.f32 %v412, %v302
    %v414 = vadd.f32 %v413, 1e-05
    %v415 = vrsqrt.pop %v414
    %v416 = vmul.f32 %v400, %v415
    %v417 = vmul.f32 %v401, %v415
    %v418 = vlaneseq
    %v419 = vshrl.u32 %v418, 7
    %v420 = vsub.s32 1, %v419
    %v421 = vrot.slane %v36, %v420
    %v422 = vmul.f32 %v416, %v421
    %v423 = vmul.f32 %v417, %v421
    %v424 = vlaneseq
    %v425 = vshrl.u32 %v424, 7
    %v426 = vsub.s32 2, %v425
    %v427 = vrot.slane %v36, %v426
    %v428 = vadd.f32 %v422, %v427
    %v429 = vadd.f32 %v423, %v427
    %vm430 = vcmp.gt.f32.partialorder %v428, 0.0
    %vm431 = vcmp.gt.f32.partialorder %v429, 0.0
    %v432 = vlaneseq
    %v433 = vshrl.u32 %v432, 7
    %v434 = vsub.s32 3, %v433
    %v435 = vrot.slane %v36, %v434
    %v436 = vmul.f32 %v435, %v428
    %v437 = vmul.f32 %v435, %v429
    %v438 = vsel %vm430, %v428, %v436
    %v439 = vsel %vm431, %v429, %v437
    %v440 = vld [vmem:[%s0 + $0x10] sm:$0xf]
    %v441 = vld [vmem:[%s0 + $0x14] sm:$0xf]
    %v442 = vld [vmem:[%s0 + $0x18] sm:$0xf]
    %v443 = vld [vmem:[%s0 + $0x1c] sm:$0xf]
    %v444 = vld [vmem:[%s0 + $0x20] sm:$0xf]
    %v445 = vld [vmem:[%s0 + $0x24] sm:$0xf]
    %v446 = vld [vmem:[%s0 + $0x28] sm:$0xf]
    %v447 = vld [vmem:[%s0 + $0x2c] sm:$0xf]
    %v448 = vpack.c.bf16 %v343, %v342
    %v449 = vpack.c.bf16 %v383, %v382
    %v458 = vunpack.c.l.b16 %v440
    %v459 = vunpack.c.l.b16 %v441
    %v460 = vunpack.c.l.b16 %v442
    %v461 = vunpack.c.l.b16 %v443
    %v462 = vunpack.c.l.b16 %v444
    %v463 = vunpack.c.l.b16 %v445
    %v464 = vunpack.c.l.b16 %v446
    %v465 = vunpack.c.l.b16 %v447
    %v466 = vpack.c.b16 %v459, %v458
    %v467 = vpack.c.b16 %v461, %v460
    %v468 = vpack.c.b16 %v463, %v462
    %v469 = vpack.c.b16 %v465, %v464
    %v475 = vsel %vm292, %v448, 0
    %v478 = vsel %vm292, %v449, 0
    %480 = vmatprep.subr.bf16.mxu0 0
    %481 = vmatpush1.bf16.msra.mxu0 %v466
    %482 = vmatprep.subr.bf16.mxu0 0
    %483 = vmatpush1.bf16.msra.mxu0 %v467
    %484 = vmatprep.subr.bf16.mxu0 0
    %485 = vmatpush1.bf16.msra.mxu0 %v468
    %486 = vmatprep.subr.bf16.mxu0 0
    %487 = vmatpush1.bf16.msra.mxu0 %v469
    %488 = vmatprep.subr.bf16.mxu0 0
    %489 = vmatpush1.bf16.msra.mxu0 0
    %490 = vmatprep.subr.bf16.mxu0 0
    %491 = vmatpush1.bf16.msra.mxu0 0
    %492 = vmatprep.subr.bf16.mxu0 0
    %493 = vmatpush1.bf16.msra.mxu0 0
    %494 = vmatprep.subr.bf16.mxu0 0
    %495 = vmatpush1.bf16.msra.mxu0 0
    %496 = vmatprep.subr.bf16.mxu0 0
    %497 = vmatpush1.bf16.msra.mxu0 0
    %498 = vmatprep.subr.bf16.mxu0 0
    %499 = vmatpush1.bf16.msra.mxu0 0
    %500 = vmatprep.subr.bf16.mxu0 0
    %501 = vmatpush1.bf16.msra.mxu0 0
    %502 = vmatprep.subr.bf16.mxu0 0
    %503 = vmatpush1.bf16.msra.mxu0 0
    %504 = vmatprep.subr.bf16.mxu0 0
    %505 = vmatpush1.bf16.msra.mxu0 0
    %506 = vmatprep.subr.bf16.mxu0 0
    %507 = vmatpush1.bf16.msra.mxu0 0
    %508 = vmatprep.subr.bf16.mxu0 0
    %509 = vmatpush1.bf16.msra.mxu0 0
    %510 = vmatprep.subr.bf16.mxu0 0
    %511 = vmatpush1.bf16.msra.mxu0 0
    %512 = vmatprep.mubr.bf16.mxu0 0
    %513 = vmatmul.mubr.bf16.gmra.mrb[0].mxu0 %v475
    %v514 = vpop.f32.mrb[0].mxu0
    %v515 = vadd.f32 0.0, %v514
    %v516 = vpop.f32.mrb[0].mxu0
    %v517 = vpop.f32.mrb[0].mxu0
    %v518 = vadd.f32 0.0, %v517
    %v519 = vpop.f32.mrb[0].mxu0
    %520 = vmatprep.mubr.bf16.mxu0 0
    %521 = vmatmul.mubr.bf16.gmra.mrb[0].mxu0 %v478
    %v522 = vpop.f32.mrb[0].mxu0
    %v523 = vadd.f32 0.0, %v522
    %v524 = vpop.f32.mrb[0].mxu0
    %v525 = vpop.f32.mrb[0].mxu0
    %v526 = vadd.f32 0.0, %v525
    %v527 = vpop.f32.mrb[0].mxu0
    %528 = vdwg.mxu0
    %v529 = vld [vmem:[%s0 + $0x40] sm:$0xf]
    %v530 = vld [vmem:[%s0 + $0x44] sm:$0xf]
    %v531 = vld [vmem:[%s0 + $0x48] sm:$0xf]
    %v532 = vld [vmem:[%s0 + $0x4c] sm:$0xf]
    %v533 = vld [vmem:[%s0 + $0x50] sm:$0xf]
    %v534 = vld [vmem:[%s0 + $0x54] sm:$0xf]
    %v535 = vld [vmem:[%s0 + $0x58] sm:$0xf]
    %v536 = vld [vmem:[%s0 + $0x5c] sm:$0xf]
    %v537 = vpack.c.bf16 %v439, %v438
    %v546 = vunpack.c.l.b16 %v529
    %v547 = vunpack.c.l.b16 %v530
    %v548 = vunpack.c.l.b16 %v531
    %v549 = vunpack.c.l.b16 %v532
    %v550 = vunpack.c.l.b16 %v533
    %v551 = vunpack.c.l.b16 %v534
    %v552 = vunpack.c.l.b16 %v535
    %v553 = vunpack.c.l.b16 %v536
    %v554 = vpack.c.b16 %v547, %v546
    %v555 = vpack.c.b16 %v549, %v548
    %v556 = vpack.c.b16 %v551, %v550
    %v557 = vpack.c.b16 %v553, %v552
    %v563 = vsel %vm292, %v537, 0
    %565 = vmatprep.subr.bf16.mxu0 0
    %566 = vmatpush1.bf16.msra.mxu0 %v554
    %567 = vmatprep.subr.bf16.mxu0 0
    %568 = vmatpush1.bf16.msra.mxu0 %v555
    %569 = vmatprep.subr.bf16.mxu0 0
    %570 = vmatpush1.bf16.msra.mxu0 %v556
    %571 = vmatprep.subr.bf16.mxu0 0
    %572 = vmatpush1.bf16.msra.mxu0 %v557
    %573 = vmatprep.subr.bf16.mxu0 0
    %574 = vmatpush1.bf16.msra.mxu0 0
    %575 = vmatprep.subr.bf16.mxu0 0
    %576 = vmatpush1.bf16.msra.mxu0 0
    %577 = vmatprep.subr.bf16.mxu0 0
    %578 = vmatpush1.bf16.msra.mxu0 0
    %579 = vmatprep.subr.bf16.mxu0 0
    %580 = vmatpush1.bf16.msra.mxu0 0
    %581 = vmatprep.subr.bf16.mxu0 0
    %582 = vmatpush1.bf16.msra.mxu0 0
    %583 = vmatprep.subr.bf16.mxu0 0
    %584 = vmatpush1.bf16.msra.mxu0 0
    %585 = vmatprep.subr.bf16.mxu0 0
    %586 = vmatpush1.bf16.msra.mxu0 0
    %587 = vmatprep.subr.bf16.mxu0 0
    %588 = vmatpush1.bf16.msra.mxu0 0
    %589 = vmatprep.subr.bf16.mxu0 0
    %590 = vmatpush1.bf16.msra.mxu0 0
    %591 = vmatprep.subr.bf16.mxu0 0
    %592 = vmatpush1.bf16.msra.mxu0 0
    %593 = vmatprep.subr.bf16.mxu0 0
    %594 = vmatpush1.bf16.msra.mxu0 0
    %595 = vmatprep.subr.bf16.mxu0 0
    %596 = vmatpush1.bf16.msra.mxu0 0
    %597 = vmatprep.mubr.bf16.mxu0 0
    %598 = vmatmul.mubr.bf16.gmra.mrb[0].mxu0 %v563
    %v599 = vpop.f32.mrb[0].mxu0
    %v600 = vadd.f32 0.0, %v599
    %v601 = vpop.f32.mrb[0].mxu0
    %v602 = vpop.f32.mrb[0].mxu0
    %v603 = vadd.f32 0.0, %v602
    %v604 = vpop.f32.mrb[0].mxu0
    %605 = vdwg.mxu0
    %v606 = vpack.c.bf16 %v518, %v515
    %v607 = vpack.c.bf16 %v526, %v523
    %v608 = vpack.c.bf16 %v603, %v600
    %609 = vmatprep.subr.bf16.mxu0 0
    %610 = vmatpush1.bf16.msra.mxu0 %v606
    %611 = vmatprep.subr.bf16.mxu0 0
    %612 = vmatpush1.bf16.msra.mxu0 %v607
    %613 = vmatprep.subr.bf16.mxu0 0
    %614 = vmatpush1.bf16.msra.mxu0 %v608
    %615 = vmatprep.subr.bf16.mxu0 0
    %616 = vmatpush1.bf16.msra.mxu0 0
    %617 = vmatprep.subr.bf16.mxu0 0
    %618 = vmatpush1.bf16.msra.mxu0 0
    %619 = vmatprep.subr.bf16.mxu0 0
    %620 = vmatpush1.bf16.msra.mxu0 0
    %621 = vmatprep.subr.bf16.mxu0 0
    %622 = vmatpush1.bf16.msra.mxu0 0
    %623 = vmatprep.subr.bf16.mxu0 0
    %624 = vmatpush1.bf16.msra.mxu0 0
    %625 = vmatprep.subr.bf16.mxu0 0
    %626 = vmatpush1.bf16.msra.mxu0 0
    %627 = vmatprep.subr.bf16.mxu0 0
    %628 = vmatpush1.bf16.msra.mxu0 0
    %629 = vmatprep.subr.bf16.mxu0 0
    %630 = vmatpush1.bf16.msra.mxu0 0
    %631 = vmatprep.subr.bf16.mxu0 0
    %632 = vmatpush1.bf16.msra.mxu0 0
    %633 = vmatprep.subr.bf16.mxu0 0
    %634 = vmatpush1.bf16.msra.mxu0 0
    %635 = vmatprep.subr.bf16.mxu0 0
    %636 = vmatpush1.bf16.msra.mxu0 0
    %637 = vmatprep.subr.bf16.mxu0 0
    %638 = vmatpush1.bf16.msra.mxu0 0
    %639 = vmatprep.subr.bf16.mxu0 0
    %640 = vmatpush1.bf16.msra.mxu0 0
    %641 = vmatprep.mubr.bf16.mxu0 0
    %642 = vmatmul.mubr.bf16.gmra.mrb[0].mxu0 %v221
    %v643 = vpop.f32.mrb[0].mxu0
    %v644 = vadd.f32 0.0, %v643
    %v645 = vpop.f32.mrb[0].mxu0
    %v646 = vpop.f32.mrb[0].mxu0
    %v647 = vadd.f32 0.0, %v646
    %v648 = vpop.f32.mrb[0].mxu0
    %649 = vmatprep.mubr.bf16.mxu0 0
    %650 = vmatmul.mubr.bf16.gmra.mrb[0].mxu0 %v224
    %v651 = vpop.f32.mrb[0].mxu0
    %v652 = vadd.f32 0.0, %v651
    %v653 = vpop.f32.mrb[0].mxu0
    %v654 = vpop.f32.mrb[0].mxu0
    %v655 = vadd.f32 0.0, %v654
    %v656 = vpop.f32.mrb[0].mxu0
    %657 = vmatprep.mubr.bf16.mxu0 0
    %658 = vmatmul.mubr.bf16.gmra.mrb[0].mxu0 %v227
    %v659 = vpop.f32.mrb[0].mxu0
    %v660 = vadd.f32 0.0, %v659
    %v661 = vpop.f32.mrb[0].mxu0
    %v662 = vpop.f32.mrb[0].mxu0
    %v663 = vadd.f32 0.0, %v662
    %v664 = vpop.f32.mrb[0].mxu0
    %665 = vdwg.mxu0
    %v666 = vlaneseq
    %v667 = vshrl.u32 %v666, 7
    %v668 = vsub.s32 4, %v667
    %v669 = vrot.slane %v35, %v668
    %v670 = vadd.f32 %v644, %v669
    %v671 = vadd.f32 %v647, %v669
    %v672 = vsel %vm48, %v670, 0.0
    %v673 = vsel %vm48, %v671, 0.0
    %v674 = vadd.f32 %v672, %v673
    %v675 = vrot.slane %v674, 4
    %v676 = vadd.f32 %v674, %v675
    %v677 = vrot.slane %v676, 2
    %v678 = vadd.f32 %v676, %v677
    %v679 = vrot.slane %v678, 1
    %v680 = vadd.f32 %v678, %v679
    %v681 = vmul.f32 %v680, %v302
    %v682 = vsub.f32 %v670, %v681
    %v683 = vsub.f32 %v671, %v681
    %v684 = vmul.f32 %v682, %v682
    %v685 = vmul.f32 %v683, %v683
    %v686 = vsel %vm48, %v684, 0.0
    %v687 = vsel %vm48, %v685, 0.0
    %v688 = vadd.f32 %v686, %v687
    %v689 = vrot.slane %v688, 4
    %v690 = vadd.f32 %v688, %v689
    %v691 = vrot.slane %v690, 2
    %v692 = vadd.f32 %v690, %v691
    %v693 = vrot.slane %v692, 1
    %v694 = vadd.f32 %v692, %v693
    %v695 = vmul.f32 %v694, %v302
    %v696 = vadd.f32 %v695, 1e-05
    %v697 = vrsqrt.pop %v696
    %v698 = vmul.f32 %v682, %v697
    %v699 = vmul.f32 %v683, %v697
    %v700 = vlaneseq
    %v701 = vshrl.u32 %v700, 7
    %v702 = vsub.s32 5, %v701
    %v703 = vrot.slane %v35, %v702
    %v704 = vmul.f32 %v698, %v703
    %v705 = vmul.f32 %v699, %v703
    %v706 = vlaneseq
    %v707 = vshrl.u32 %v706, 7
    %v708 = vsub.s32 6, %v707
    %v709 = vrot.slane %v35, %v708
    %v710 = vadd.f32 %v704, %v709
    %v711 = vadd.f32 %v705, %v709
    %vm712 = vcmp.gt.f32.partialorder %v710, 0.0
    %vm713 = vcmp.gt.f32.partialorder %v711, 0.0
    %v714 = vlaneseq
    %v715 = vshrl.u32 %v714, 7
    %v716 = vsub.s32 7, %v715
    %v717 = vrot.slane %v35, %v716
    %v718 = vmul.f32 %v717, %v710
    %v719 = vmul.f32 %v717, %v711
    %v720 = vsel %vm712, %v710, %v718
    %v721 = vsel %vm713, %v711, %v719
    %v722 = vadd.f32 %v652, %v669
    %v723 = vadd.f32 %v655, %v669
    %v724 = vsel %vm48, %v722, 0.0
    %v725 = vsel %vm48, %v723, 0.0
    %v726 = vadd.f32 %v724, %v725
    %v727 = vrot.slane %v726, 4
    %v728 = vadd.f32 %v726, %v727
    %v729 = vrot.slane %v728, 2
    %v730 = vadd.f32 %v728, %v729
    %v731 = vrot.slane %v730, 1
    %v732 = vadd.f32 %v730, %v731
    %v733 = vmul.f32 %v732, %v302
    %v734 = vsub.f32 %v722, %v733
    %v735 = vsub.f32 %v723, %v733
    %v736 = vmul.f32 %v734, %v734
    %v737 = vmul.f32 %v735, %v735
    %v738 = vsel %vm48, %v736, 0.0
    %v739 = vsel %vm48, %v737, 0.0
    %v740 = vadd.f32 %v738, %v739
    %v741 = vrot.slane %v740, 4
    %v742 = vadd.f32 %v740, %v741
    %v743 = vrot.slane %v742, 2
    %v744 = vadd.f32 %v742, %v743
    %v745 = vrot.slane %v744, 1
    %v746 = vadd.f32 %v744, %v745
    %v747 = vmul.f32 %v746, %v302
    %v748 = vadd.f32 %v747, 1e-05
    %v749 = vrsqrt.pop %v748
    %v750 = vmul.f32 %v734, %v749
    %v751 = vmul.f32 %v735, %v749
    %v752 = vmul.f32 %v750, %v703
    %v753 = vmul.f32 %v751, %v703
    %v754 = vadd.f32 %v752, %v709
    %v755 = vadd.f32 %v753, %v709
    %vm756 = vcmp.gt.f32.partialorder %v754, 0.0
    %vm757 = vcmp.gt.f32.partialorder %v755, 0.0
    %v758 = vmul.f32 %v717, %v754
    %v759 = vmul.f32 %v717, %v755
    %v760 = vsel %vm756, %v754, %v758
    %v761 = vsel %vm757, %v755, %v759
    %v762 = vlaneseq
    %v763 = vshrl.u32 %v762, 7
    %v764 = vsub.s32 4, %v763
    %v765 = vrot.slane %v36, %v764
    %v766 = vadd.f32 %v660, %v765
    %v767 = vadd.f32 %v663, %v765
    %v768 = vsel %vm48, %v766, 0.0
    %v769 = vsel %vm48, %v767, 0.0
    %v770 = vadd.f32 %v768, %v769
    %v771 = vrot.slane %v770, 4
    %v772 = vadd.f32 %v770, %v771
    %v773 = vrot.slane %v772, 2
    %v774 = vadd.f32 %v772, %v773
    %v775 = vrot.slane %v774, 1
    %v776 = vadd.f32 %v774, %v775
    %v777 = vmul.f32 %v776, %v302
    %v778 = vsub.f32 %v766, %v777
    %v779 = vsub.f32 %v767, %v777
    %v780 = vmul.f32 %v778, %v778
    %v781 = vmul.f32 %v779, %v779
    %v782 = vsel %vm48, %v780, 0.0
    %v783 = vsel %vm48, %v781, 0.0
    %v784 = vadd.f32 %v782, %v783
    %v785 = vrot.slane %v784, 4
    %v786 = vadd.f32 %v784, %v785
    %v787 = vrot.slane %v786, 2
    %v788 = vadd.f32 %v786, %v787
    %v789 = vrot.slane %v788, 1
    %v790 = vadd.f32 %v788, %v789
    %v791 = vmul.f32 %v790, %v302
    %v792 = vadd.f32 %v791, 1e-05
    %v793 = vrsqrt.pop %v792
    %v794 = vmul.f32 %v778, %v793
    %v795 = vmul.f32 %v779, %v793
    %v796 = vlaneseq
    %v797 = vshrl.u32 %v796, 7
    %v798 = vsub.s32 5, %v797
    %v799 = vrot.slane %v36, %v798
    %v800 = vmul.f32 %v794, %v799
    %v801 = vmul.f32 %v795, %v799
    %v802 = vlaneseq
    %v803 = vshrl.u32 %v802, 7
    %v804 = vsub.s32 6, %v803
    %v805 = vrot.slane %v36, %v804
    %v806 = vadd.f32 %v800, %v805
    %v807 = vadd.f32 %v801, %v805
    %vm808 = vcmp.gt.f32.partialorder %v806, 0.0
    %vm809 = vcmp.gt.f32.partialorder %v807, 0.0
    %v810 = vlaneseq
    %v811 = vshrl.u32 %v810, 7
    %v812 = vsub.s32 7, %v811
    %v813 = vrot.slane %v36, %v812
    %v814 = vmul.f32 %v813, %v806
    %v815 = vmul.f32 %v813, %v807
    %v816 = vsel %vm808, %v806, %v814
    %v817 = vsel %vm809, %v807, %v815
    %v818 = vld [vmem:[%s0 + $0x60] sm:$0xf]
    %v819 = vld [vmem:[%s0 + $0x64] sm:$0xf]
    %v820 = vld [vmem:[%s0 + $0x68] sm:$0xf]
    %v821 = vld [vmem:[%s0 + $0x6c] sm:$0xf]
    %v822 = vpack.c.bf16 %v721, %v720
    %v823 = vpack.c.bf16 %v761, %v760
    %v824 = vpack.c.bf16 %v817, %v816
    %v825 = vlaneseq
    %v826 = vshrl.u32 %v825, 7
    %v827 = vsub.s32 0, %v826
    %v828 = vrot.slane %v37, %v827
    %v833 = vunpack.c.l.b16 %v818
    %v834 = vunpack.c.l.b16 %v819
    %v835 = vunpack.c.l.b16 %v820
    %v836 = vunpack.c.l.b16 %v821
    %v837 = vpack.c.b16 %v834, %v833
    %v838 = vpack.c.b16 %v836, %v835
    %v842 = vsel %vm48, %v822, 0
    %v845 = vsel %vm48, %v823, 0
    %v848 = vsel %vm48, %v824, 0
    %850 = vmatprep.subr.bf16.mxu0 0
    %851 = vmatpush1.bf16.msra.mxu0 %v837
    %852 = vmatprep.subr.bf16.mxu0 0
    %853 = vmatpush1.bf16.msra.mxu0 %v838
    %854 = vmatprep.subr.bf16.mxu0 0
    %855 = vmatpush1.bf16.msra.mxu0 0
    %856 = vmatprep.subr.bf16.mxu0 0
    %857 = vmatpush1.bf16.msra.mxu0 0
    %858 = vmatprep.subr.bf16.mxu0 0
    %859 = vmatpush1.bf16.msra.mxu0 0
    %860 = vmatprep.subr.bf16.mxu0 0
    %861 = vmatpush1.bf16.msra.mxu0 0
    %862 = vmatprep.subr.bf16.mxu0 0
    %863 = vmatpush1.bf16.msra.mxu0 0
    %864 = vmatprep.subr.bf16.mxu0 0
    %865 = vmatpush1.bf16.msra.mxu0 0
    %866 = vmatprep.subr.bf16.mxu0 0
    %867 = vmatpush1.bf16.msra.mxu0 0
    %868 = vmatprep.subr.bf16.mxu0 0
    %869 = vmatpush1.bf16.msra.mxu0 0
    %870 = vmatprep.subr.bf16.mxu0 0
    %871 = vmatpush1.bf16.msra.mxu0 0
    %872 = vmatprep.subr.bf16.mxu0 0
    %873 = vmatpush1.bf16.msra.mxu0 0
    %874 = vmatprep.subr.bf16.mxu0 0
    %875 = vmatpush1.bf16.msra.mxu0 0
    %876 = vmatprep.subr.bf16.mxu0 0
    %877 = vmatpush1.bf16.msra.mxu0 0
    %878 = vmatprep.subr.bf16.mxu0 0
    %879 = vmatpush1.bf16.msra.mxu0 0
    %880 = vmatprep.subr.bf16.mxu0 0
    %881 = vmatpush1.bf16.msra.mxu0 0
    %882 = vmatprep.mubr.bf16.mxu0 0
    %883 = vmatmul.mubr.bf16.gmra.mrb[0].mxu0 %v842
    %v884 = vpop.f32.mrb[0].mxu0
    %v885 = vadd.f32 %v828, %v884
    %v886 = vpop.f32.mrb[0].mxu0
    %v887 = vpop.f32.mrb[0].mxu0
    %v888 = vadd.f32 %v828, %v887
    %v889 = vpop.f32.mrb[0].mxu0
    %890 = vmatprep.mubr.bf16.mxu0 0
    %891 = vmatmul.mubr.bf16.gmra.mrb[0].mxu0 %v845
    %v892 = vpop.f32.mrb[0].mxu0
    %v893 = vadd.f32 %v828, %v892
    %v894 = vpop.f32.mrb[0].mxu0
    %v895 = vpop.f32.mrb[0].mxu0
    %v896 = vadd.f32 %v828, %v895
    %v897 = vpop.f32.mrb[0].mxu0
    %898 = vmatprep.mubr.bf16.mxu0 0
    %899 = vmatmul.mubr.bf16.gmra.mrb[0].mxu0 %v848
    %v900 = vpop.f32.mrb[0].mxu0
    %v901 = vadd.f32 %v828, %v900
    %v902 = vpop.f32.mrb[0].mxu0
    %v903 = vpop.f32.mrb[0].mxu0
    %v904 = vadd.f32 %v828, %v903
    %v905 = vpop.f32.mrb[0].mxu0
    %906 = vdwg.mxu0
    %v907 = vsel %vm48, %v885, 0.0
    %v908 = vsel %vm48, %v888, 0.0
    %v909 = vadd.f32 %v907, %v908
    %v910 = vrot.slane %v909, 4
    %v911 = vadd.f32 %v909, %v910
    %v912 = vrot.slane %v911, 2
    %v913 = vadd.f32 %v911, %v912
    %v914 = vrot.slane %v913, 1
    %v915 = vadd.f32 %v913, %v914
    %v916 = vmul.f32 %v915, %v302
    %v917 = vsub.f32 %v885, %v916
    %v918 = vsub.f32 %v888, %v916
    %v919 = vmul.f32 %v917, %v917
    %v920 = vmul.f32 %v918, %v918
    %v921 = vsel %vm48, %v919, 0.0
    %v922 = vsel %vm48, %v920, 0.0
    %v923 = vadd.f32 %v921, %v922
    %v924 = vrot.slane %v923, 4
    %v925 = vadd.f32 %v923, %v924
    %v926 = vrot.slane %v925, 2
    %v927 = vadd.f32 %v925, %v926
    %v928 = vrot.slane %v927, 1
    %v929 = vadd.f32 %v927, %v928
    %v930 = vmul.f32 %v929, %v302
    %v931 = vadd.f32 %v930, 1e-05
    %v932 = vrsqrt.pop %v931
    %v933 = vmul.f32 %v917, %v932
    %v934 = vmul.f32 %v918, %v932
    %v935 = vlaneseq
    %v936 = vshrl.u32 %v935, 7
    %v937 = vsub.s32 1, %v936
    %v938 = vrot.slane %v37, %v937
    %v939 = vmul.f32 %v933, %v938
    %v940 = vmul.f32 %v934, %v938
    %v941 = vlaneseq
    %v942 = vshrl.u32 %v941, 7
    %v943 = vsub.s32 2, %v942
    %v944 = vrot.slane %v37, %v943
    %v945 = vadd.f32 %v939, %v944
    %v946 = vadd.f32 %v940, %v944
    %v947 = vmax.f32 %v945, 0.0
    %v948 = vmax.f32 %v946, 0.0
    %v949 = vsel %vm48, %v893, 0.0
    %v950 = vsel %vm48, %v896, 0.0
    %v951 = vadd.f32 %v949, %v950
    %v952 = vrot.slane %v951, 4
    %v953 = vadd.f32 %v951, %v952
    %v954 = vrot.slane %v953, 2
    %v955 = vadd.f32 %v953, %v954
    %v956 = vrot.slane %v955, 1
    %v957 = vadd.f32 %v955, %v956
    %v958 = vmul.f32 %v957, %v302
    %v959 = vsub.f32 %v893, %v958
    %v960 = vsub.f32 %v896, %v958
    %v961 = vmul.f32 %v959, %v959
    %v962 = vmul.f32 %v960, %v960
    %v963 = vsel %vm48, %v961, 0.0
    %v964 = vsel %vm48, %v962, 0.0
    %v965 = vadd.f32 %v963, %v964
    %v966 = vrot.slane %v965, 4
    %v967 = vadd.f32 %v965, %v966
    %v968 = vrot.slane %v967, 2
    %v969 = vadd.f32 %v967, %v968
    %v970 = vrot.slane %v969, 1
    %v971 = vadd.f32 %v969, %v970
    %v972 = vmul.f32 %v971, %v302
    %v973 = vadd.f32 %v972, 1e-05
    %v974 = vrsqrt.pop %v973
    %v975 = vmul.f32 %v959, %v974
    %v976 = vmul.f32 %v960, %v974
    %v977 = vmul.f32 %v975, %v938
    %v978 = vmul.f32 %v976, %v938
    %v979 = vadd.f32 %v977, %v944
    %v980 = vadd.f32 %v978, %v944
    %v981 = vmax.f32 %v979, 0.0
    %v982 = vmax.f32 %v980, 0.0
    %v983 = vsel %vm48, %v901, 0.0
    %v984 = vsel %vm48, %v904, 0.0
    %v985 = vadd.f32 %v983, %v984
    %v986 = vrot.slane %v985, 4
    %v987 = vadd.f32 %v985, %v986
    %v988 = vrot.slane %v987, 2
    %v989 = vadd.f32 %v987, %v988
    %v990 = vrot.slane %v989, 1
    %v991 = vadd.f32 %v989, %v990
    %v992 = vmul.f32 %v991, %v302
    %v993 = vsub.f32 %v901, %v992
    %v994 = vsub.f32 %v904, %v992
    %v995 = vmul.f32 %v993, %v993
    %v996 = vmul.f32 %v994, %v994
    %v997 = vsel %vm48, %v995, 0.0
    %v998 = vsel %vm48, %v996, 0.0
    %v999 = vadd.f32 %v997, %v998
    %v1000 = vrot.slane %v999, 4
    %v1001 = vadd.f32 %v999, %v1000
    %v1002 = vrot.slane %v1001, 2
    %v1003 = vadd.f32 %v1001, %v1002
    %v1004 = vrot.slane %v1003, 1
    %v1005 = vadd.f32 %v1003, %v1004
    %v1006 = vmul.f32 %v1005, %v302
    %v1007 = vadd.f32 %v1006, 1e-05
    %v1008 = vrsqrt.pop %v1007
    %v1009 = vmul.f32 %v993, %v1008
    %v1010 = vmul.f32 %v994, %v1008
    %v1011 = vmul.f32 %v1009, %v938
    %v1012 = vmul.f32 %v1010, %v938
    %v1013 = vadd.f32 %v1011, %v944
    %v1014 = vadd.f32 %v1012, %v944
    %v1015 = vmax.f32 %v1013, 0.0
    %v1016 = vmax.f32 %v1014, 0.0
    %v1017 = vlaneseq
    %v1018 = vshrl.u32 %v1017, 7
    %v1019 = vsub.s32 3, %v1018
    %v1020 = vrot.slane %v37, %v1019
    %v1021 = vmul.f32 %v947, %v1020
    %v1022 = vmul.f32 %v948, %v1020
    %v1023 = vmul.f32 %v981, %v1020
    %v1024 = vmul.f32 %v982, %v1020
    %v1025 = vmul.f32 %v1015, %v1020
    %v1026 = vmul.f32 %v1016, %v1020
    %v1027 = vsel %vm48, %v1021, 0.0
    %1028 = vadd.xlane.f32.xlu0 %v1027
    %v1029 = vpop.xlane.xlu0 %1028
    %v1030 = vsel %vm48, %v1022, 0.0
    %1031 = vadd.xlane.f32.xlu0 %v1030
    %v1032 = vpop.xlane.xlu0 %1031
    %v1033 = vsel %vm48, %v1023, 0.0
    %1034 = vadd.xlane.f32.xlu0 %v1033
    %v1035 = vpop.xlane.xlu0 %1034
    %v1036 = vsel %vm48, %v1024, 0.0
    %1037 = vadd.xlane.f32.xlu0 %v1036
    %v1038 = vpop.xlane.xlu0 %1037
    %v1039 = vsel %vm48, %v1025, 0.0
    %1040 = vadd.xlane.f32.xlu0 %v1039
    %v1041 = vpop.xlane.xlu0 %1040
    %v1042 = vsel %vm48, %v1026, 0.0
    %1043 = vadd.xlane.f32.xlu0 %v1042
    %v1044 = vpop.xlane.xlu0 %1043
    %v1045 = vlaneseq
    %v1046 = vshrl.u32 %v1045, 7
    %v1047 = vsub.s32 4, %v1046
    %v1048 = vrot.slane %v37, %v1047
    %v1049 = vadd.f32 %v1029, %v1048
    %v1050 = vadd.f32 %v1032, %v1048
    %v1051 = vadd.f32 %v1035, %v1048
    %v1052 = vadd.f32 %v1038, %v1048
    %v1053 = vadd.f32 %v1041, %v1048
    %v1054 = vadd.f32 %v1044, %v1048
    %v1055 = vld [vmem:[%s4] sm:$0xff]
    %v1056 = vld [vmem:[%s4 + $0x8] sm:$0xff]
    %vm1057 = vcmask 31744
    %v1058 = vsel %vm1057, %v1055, 0.0
    %v1059 = vsel %vm1057, %v1056, 0.0
    %vm1060 = vcmask 64512
    %v1061 = vsel %vm1060, %v1058, 0.0
    %v1062 = vsel %vm1060, %v1059, 0.0
    %1065 = vrot.lane.b32.xlu0 %v1055, 4
    %v1066 = vpop.permute.xlu0 %1065
    %1067 = vrot.lane.b32.xlu0 %v1056, 4
    %v1068 = vpop.permute.xlu0 %1067
    %v1071 = vsel %vm1057, 0.0, %v1066
    %v1072 = vsel %vm1057, 0.0, %v1068
    %v1073 = vsel %vm1060, %v1071, 0.0
    %v1074 = vsel %vm1060, %v1072, 0.0
    %1075 = vrot.lane.b32.xlu0 %v1055, 8
    %v1076 = vpop.permute.xlu0 %1075
    %1077 = vrot.lane.b32.xlu0 %v1056, 8
    %v1078 = vpop.permute.xlu0 %1077
    %v1081 = vsel %vm1060, 0.0, %v1076
    %v1082 = vsel %vm1060, 0.0, %v1078
    %vm1083 = vcmp.gt.f32.partialorder %v1061, 0.0
    %vm1084 = vcmp.gt.f32.partialorder %v1062, 0.0
    %vm1085 = vcmp.gt.f32.partialorder %v1073, 0.0
    %vm1086 = vcmp.gt.f32.partialorder %v1074, 0.0
    %vm1087 = vcmp.gt.f32.partialorder %v1081, 0.0
    %vm1088 = vcmp.gt.f32.partialorder %v1082, 0.0
    %1090 = vset.pattern.permute.xlu0 0
    %1091 = vperm.xlu0 %1090, %v1049
    %v1092 = vpop.permute.xlu0 %1091
    %1095 = vset.pattern.permute.xlu0 0
    %1096 = vperm.xlu0 %1095, %v1050
    %v1097 = vpop.permute.xlu0 %1096
    %1100 = vset.pattern.permute.xlu0 0
    %1101 = vperm.xlu0 %1100, %v1051
    %v1102 = vpop.permute.xlu0 %1101
    %1105 = vset.pattern.permute.xlu0 0
    %1106 = vperm.xlu0 %1105, %v1052
    %v1107 = vpop.permute.xlu0 %1106
    %1110 = vset.pattern.permute.xlu0 0
    %1111 = vperm.xlu0 %1110, %v1053
    %v1112 = vpop.permute.xlu0 %1111
    %1115 = vset.pattern.permute.xlu0 0
    %1116 = vperm.xlu0 %1115, %v1054
    %v1117 = vpop.permute.xlu0 %1116
    %v1119 = vsel %vm1083, %v1092, -1e+30
    %v1120 = vsel %vm1084, %v1097, -1e+30
    %v1121 = vsel %vm1085, %v1102, -1e+30
    %v1122 = vsel %vm1086, %v1107, -1e+30
    %v1123 = vsel %vm1087, %v1112, -1e+30
    %v1124 = vsel %vm1088, %v1117, -1e+30
    %vm1125 = vcmask 97280
    %v1126 = vsel %vm1125, %v1119, -inf
    %v1127 = vsel %vm1125, %v1120, -inf
    %v1128 = vsel %vm1125, %v1121, -inf
    %v1129 = vsel %vm1125, %v1122, -inf
    %v1130 = vsel %vm1125, %v1123, -inf
    %v1131 = vmax.f32 %v1126, %v1130
    %v1132 = vsel %vm1125, %v1124, -inf
    %v1133 = vmax.f32 %v1127, %v1132
    %v1134 = vmax.f32 %v1131, %v1133
    %v1135 = vmax.f32 %v1128, %v1129
    %v1136 = vmax.f32 %v1134, %v1135
    %v1137 = vrot.slane %v1136, 4
    %v1138 = vmax.f32 %v1136, %v1137
    %v1139 = vrot.slane %v1138, 2
    %v1140 = vmax.f32 %v1138, %v1139
    %v1141 = vrot.slane %v1140, 1
    %v1142 = vmax.f32 %v1140, %v1141
    %v1143 = vsub.f32 %v1119, %v1142
    %v1144 = vsub.f32 %v1120, %v1142
    %v1145 = vsub.f32 %v1121, %v1142
    %v1146 = vsub.f32 %v1122, %v1142
    %v1147 = vsub.f32 %v1123, %v1142
    %v1148 = vsub.f32 %v1124, %v1142
    %v1149 = vmul.f32 %v1143, 1.442695
    %v1150 = vpow.pop %v1149
    %v1151 = vmul.f32 %v1144, 1.442695
    %v1152 = vpow.pop %v1151
    %v1153 = vmul.f32 %v1145, 1.442695
    %v1154 = vpow.pop %v1153
    %v1155 = vmul.f32 %v1146, 1.442695
    %v1156 = vpow.pop %v1155
    %v1157 = vmul.f32 %v1147, 1.442695
    %v1158 = vpow.pop %v1157
    %v1159 = vmul.f32 %v1148, 1.442695
    %v1160 = vpow.pop %v1159
    %v1161 = vmul.f32 %v1150, %v1061
    %v1162 = vmul.f32 %v1152, %v1062
    %v1163 = vmul.f32 %v1154, %v1073
    %v1164 = vmul.f32 %v1156, %v1074
    %v1165 = vmul.f32 %v1158, %v1081
    %v1166 = vmul.f32 %v1160, %v1082
    %v1167 = vsel %vm1125, %v1161, 0.0
    %v1168 = vsel %vm1125, %v1162, 0.0
    %v1169 = vadd.f32 %v1167, %v1168
    %v1170 = vsel %vm1125, %v1163, 0.0
    %v1171 = vadd.f32 %v1169, %v1170
    %v1172 = vsel %vm1125, %v1164, 0.0
    %v1173 = vadd.f32 %v1171, %v1172
    %v1174 = vsel %vm1125, %v1165, 0.0
    %v1175 = vadd.f32 %v1173, %v1174
    %v1176 = vsel %vm1125, %v1166, 0.0
    %v1177 = vadd.f32 %v1175, %v1176
    %v1178 = vrot.slane %v1177, 4
    %v1179 = vadd.f32 %v1177, %v1178
    %v1180 = vrot.slane %v1179, 2
    %v1181 = vadd.f32 %v1179, %v1180
    %v1182 = vrot.slane %v1181, 1
    %v1183 = vadd.f32 %v1181, %v1182
    %v1184 = vmax.f32 %v1183, 1e-30
    %v1185 = vrcp.pop %v1184
    %v1186 = vmul.f32 %v1161, %v1185
    %v1187 = vmul.f32 %v1162, %v1185
    %v1188 = vmul.f32 %v1163, %v1185
    %v1189 = vmul.f32 %v1164, %v1185
    %v1190 = vmul.f32 %v1165, %v1185
    %v1191 = vmul.f32 %v1166, %v1185
    %v1192 = vpack.c.bf16 %v1187, %v1186
    %v1193 = vpack.c.bf16 %v1189, %v1188
    %v1194 = vpack.c.bf16 %v1191, %v1190
    %1195 = vxpose.xlu0.c.b16.start [1/8] %v1192, 128
    %1196 = vxpose.xlu0.c.b16.cont [2/8] %v1193, 128
    %1197 = vxpose.xlu0.c.b16.cont [3/8] %v1194, 128
    %1198 = vxpose.xlu0.c.b16.cont [4/8] 0, 128
    %1199 = vxpose.xlu0.c.b16.cont [5/8] 0, 128
    %1200 = vxpose.xlu0.c.b16.cont [6/8] 0, 128
    %1201 = vxpose.xlu0.c.b16.cont [7/8] 0, 128
    %1202 = vxpose.xlu0.c.b16.end [8/8] 0, 128
    %v1203 = vpop.trf.xlu0
    %v1204 = vpop.trf.xlu0
    %v1205 = vpop.trf.xlu0
    %v1206 = vpop.trf.xlu0
    %v1207 = vpop.trf.xlu0
    %v1208 = vpop.trf.xlu0
    %v1209 = vpop.trf.xlu0
    %v1210 = vpop.trf.xlu0
    %v1212 = vsel %vm219, %v1203, 0
    %1214 = vmatprep.subr.bf16.mxu0 0
    %1215 = vmatpush1.bf16.msra.mxu0 %v822
    %1216 = vmatprep.subr.bf16.mxu0 0
    %1217 = vmatpush1.bf16.msra.mxu0 %v823
    %1218 = vmatprep.subr.bf16.mxu0 0
    %1219 = vmatpush1.bf16.msra.mxu0 %v824
    %1220 = vmatprep.subr.bf16.mxu0 0
    %1221 = vmatpush1.bf16.msra.mxu0 0
    %1222 = vmatprep.subr.bf16.mxu0 0
    %1223 = vmatpush1.bf16.msra.mxu0 0
    %1224 = vmatprep.subr.bf16.mxu0 0
    %1225 = vmatpush1.bf16.msra.mxu0 0
    %1226 = vmatprep.subr.bf16.mxu0 0
    %1227 = vmatpush1.bf16.msra.mxu0 0
    %1228 = vmatprep.subr.bf16.mxu0 0
    %1229 = vmatpush1.bf16.msra.mxu0 0
    %1230 = vmatprep.subr.bf16.mxu0 0
    %1231 = vmatpush1.bf16.msra.mxu0 0
    %1232 = vmatprep.subr.bf16.mxu0 0
    %1233 = vmatpush1.bf16.msra.mxu0 0
    %1234 = vmatprep.subr.bf16.mxu0 0
    %1235 = vmatpush1.bf16.msra.mxu0 0
    %1236 = vmatprep.subr.bf16.mxu0 0
    %1237 = vmatpush1.bf16.msra.mxu0 0
    %1238 = vmatprep.subr.bf16.mxu0 0
    %1239 = vmatpush1.bf16.msra.mxu0 0
    %1240 = vmatprep.subr.bf16.mxu0 0
    %1241 = vmatpush1.bf16.msra.mxu0 0
    %1242 = vmatprep.subr.bf16.mxu0 0
    %1243 = vmatpush1.bf16.msra.mxu0 0
    %1244 = vmatprep.subr.bf16.mxu0 0
    %1245 = vmatpush1.bf16.msra.mxu0 0
    %1246 = vmatprep.mubr.bf16.mxu0 0
    %1247 = vmatmul.mubr.bf16.gmra.mrb[0].mxu0 %v1212
    %v1248 = vpop.f32.mrb[0].mxu0
    %v1249 = vadd.f32 0.0, %v1248
    %v1250 = vpop.f32.mrb[0].mxu0
    %v1251 = vpop.f32.mrb[0].mxu0
    %v1252 = vadd.f32 0.0, %v1251
    %v1253 = vpop.f32.mrb[0].mxu0
    %1254 = vdwg.mxu0
    %v1255 = vld [vmem:[%s0 + $0x70] sm:$0xf]
    %v1256 = vld [vmem:[%s0 + $0x74] sm:$0xf]
    %v1257 = vld [vmem:[%s0 + $0x78] sm:$0xf]
    %v1258 = vld [vmem:[%s0 + $0x7c] sm:$0xf]
    %v1259 = vpack.c.bf16 %v1249, %v1249
    %v1260 = vlaneseq
    %v1261 = vshrl.u32 %v1260, 7
    %v1262 = vsub.s32 5, %v1261
    %v1263 = vrot.slane %v37, %v1262
    %v1268 = vunpack.c.l.b16 %v1255
    %v1269 = vunpack.c.l.b16 %v1256
    %v1270 = vunpack.c.l.b16 %v1257
    %v1271 = vunpack.c.l.b16 %v1258
    %v1272 = vpack.c.b16 %v1269, %v1268
    %v1273 = vpack.c.b16 %v1271, %v1270
    %v1277 = vsel %vm48, %v1259, 0
    %1279 = vmatprep.subr.bf16.mxu0 0
    %1280 = vmatpush1.bf16.msra.mxu0 %v1272
    %1281 = vmatprep.subr.bf16.mxu0 0
    %1282 = vmatpush1.bf16.msra.mxu0 %v1273
    %1283 = vmatprep.subr.bf16.mxu0 0
    %1284 = vmatpush1.bf16.msra.mxu0 0
    %1285 = vmatprep.subr.bf16.mxu0 0
    %1286 = vmatpush1.bf16.msra.mxu0 0
    %1287 = vmatprep.subr.bf16.mxu0 0
    %1288 = vmatpush1.bf16.msra.mxu0 0
    %1289 = vmatprep.subr.bf16.mxu0 0
    %1290 = vmatpush1.bf16.msra.mxu0 0
    %1291 = vmatprep.subr.bf16.mxu0 0
    %1292 = vmatpush1.bf16.msra.mxu0 0
    %1293 = vmatprep.subr.bf16.mxu0 0
    %1294 = vmatpush1.bf16.msra.mxu0 0
    %1295 = vmatprep.subr.bf16.mxu0 0
    %1296 = vmatpush1.bf16.msra.mxu0 0
    %1297 = vmatprep.subr.bf16.mxu0 0
    %1298 = vmatpush1.bf16.msra.mxu0 0
    %1299 = vmatprep.subr.bf16.mxu0 0
    %1300 = vmatpush1.bf16.msra.mxu0 0
    %1301 = vmatprep.subr.bf16.mxu0 0
    %1302 = vmatpush1.bf16.msra.mxu0 0
    %1303 = vmatprep.subr.bf16.mxu0 0
    %1304 = vmatpush1.bf16.msra.mxu0 0
    %1305 = vmatprep.subr.bf16.mxu0 0
    %1306 = vmatpush1.bf16.msra.mxu0 0
    %1307 = vmatprep.subr.bf16.mxu0 0
    %1308 = vmatpush1.bf16.msra.mxu0 0
    %1309 = vmatprep.subr.bf16.mxu0 0
    %1310 = vmatpush1.bf16.msra.mxu0 0
    %1311 = vmatprep.mubr.bf16.mxu0 0
    %1312 = vmatmul.mubr.bf16.gmra.mrb[0].mxu0 %v1277
    %v1313 = vpop.f32.mrb[0].mxu0
    %v1314 = vadd.f32 %v1263, %v1313
    %v1315 = vpop.f32.mrb[0].mxu0
    %v1316 = vpop.f32.mrb[0].mxu0
    %v1317 = vpop.f32.mrb[0].mxu0
    %1318 = vdwg.mxu0
    %vm1319 = vcmask 519168
    %v1320 = vsel %vm1319, %v1314, 0.0
    %v1321 = vrot.slane %v1320, 4
    %v1322 = vadd.f32 %v1320, %v1321
    %v1323 = vrot.slane %v1322, 2
    %v1324 = vadd.f32 %v1322, %v1323
    %v1325 = vrot.slane %v1324, 1
    %v1326 = vadd.f32 %v1324, %v1325
    %v1327 = vrcp.pop 4.0
    %v1328 = vmul.f32 %v1326, %v1327
    %v1329 = vsub.f32 %v1314, %v1328
    %v1330 = vmul.f32 %v1329, %v1329
    %v1331 = vsel %vm1319, %v1330, 0.0
    %v1332 = vrot.slane %v1331, 4
    %v1333 = vadd.f32 %v1331, %v1332
    %v1334 = vrot.slane %v1333, 2
    %v1335 = vadd.f32 %v1333, %v1334
    %v1336 = vrot.slane %v1335, 1
    %v1337 = vadd.f32 %v1335, %v1336
    %v1338 = vmul.f32 %v1337, %v1327
    %v1339 = vadd.f32 %v1338, 1e-05
    %v1340 = vrsqrt.pop %v1339
    %v1341 = vmul.f32 %v1329, %v1340
    %v1342 = vlaneseq
    %v1343 = vshrl.u32 %v1342, 7
    %v1344 = vsub.s32 6, %v1343
    %v1345 = vrot.slane %v37, %v1344
    %v1346 = vmul.f32 %v1341, %v1345
    %v1347 = vlaneseq
    %v1348 = vshrl.u32 %v1347, 7
    %v1349 = vsub.s32 7, %v1348
    %v1350 = vrot.slane %v37, %v1349
    %v1351 = vadd.f32 %v1346, %v1350
    %vm1352 = vcmp.gt.f32.partialorder %v1351, 0.0
    %v1353 = vlaneseq
    %v1354 = vshrl.u32 %v1353, 7
    %v1355 = vsub.s32 0, %v1354
    %v1356 = vrot.slane %v38, %v1355
    %v1357 = vmul.f32 %v1356, %v1351
    %v1358 = vsel %vm1352, %v1351, %v1357
    %v1359 = vld [vmem:[%s0 + $0x80] sm:$0xf]
    %v1360 = vld [vmem:[%s0 + $0x84] sm:$0xf]
    %v1361 = vld [vmem:[%s0 + $0x88] sm:$0xf]
    %v1362 = vld [vmem:[%s0 + $0x8c] sm:$0xf]
    %v1363 = vld [vmem:[%s0 + $0x90] sm:$0xf]
    %v1364 = vld [vmem:[%s0 + $0x94] sm:$0xf]
    %v1365 = vld [vmem:[%s0 + $0x98] sm:$0xf]
    %v1366 = vld [vmem:[%s0 + $0x9c] sm:$0xf]
    %v1367 = vpack.c.bf16 %v1358, %v1358
    %v1368 = vlaneseq
    %v1369 = vshrl.u32 %v1368, 7
    %v1370 = vsub.s32 1, %v1369
    %v1371 = vrot.slane %v38, %v1370
    %v1380 = vunpack.c.l.b16 %v1359
    %v1381 = vunpack.c.l.b16 %v1360
    %v1382 = vunpack.c.l.b16 %v1361
    %v1383 = vunpack.c.l.b16 %v1362
    %v1384 = vunpack.c.l.b16 %v1363
    %v1385 = vunpack.c.l.b16 %v1364
    %v1386 = vunpack.c.l.b16 %v1365
    %v1387 = vunpack.c.l.b16 %v1366
    %v1388 = vpack.c.b16 %v1381, %v1380
    %v1389 = vpack.c.b16 %v1383, %v1382
    %v1390 = vpack.c.b16 %v1385, %v1384
    %v1391 = vpack.c.b16 %v1387, %v1386
    %v1397 = vsel %vm292, %v1367, 0
    %1399 = vmatprep.subr.bf16.mxu0 0
    %1400 = vmatpush1.bf16.msra.mxu0 %v1388
    %1401 = vmatprep.subr.bf16.mxu0 0
    %1402 = vmatpush1.bf16.msra.mxu0 %v1389
    %1403 = vmatprep.subr.bf16.mxu0 0
    %1404 = vmatpush1.bf16.msra.mxu0 %v1390
    %1405 = vmatprep.subr.bf16.mxu0 0
    %1406 = vmatpush1.bf16.msra.mxu0 %v1391
    %1407 = vmatprep.subr.bf16.mxu0 0
    %1408 = vmatpush1.bf16.msra.mxu0 0
    %1409 = vmatprep.subr.bf16.mxu0 0
    %1410 = vmatpush1.bf16.msra.mxu0 0
    %1411 = vmatprep.subr.bf16.mxu0 0
    %1412 = vmatpush1.bf16.msra.mxu0 0
    %1413 = vmatprep.subr.bf16.mxu0 0
    %1414 = vmatpush1.bf16.msra.mxu0 0
    %1415 = vmatprep.subr.bf16.mxu0 0
    %1416 = vmatpush1.bf16.msra.mxu0 0
    %1417 = vmatprep.subr.bf16.mxu0 0
    %1418 = vmatpush1.bf16.msra.mxu0 0
    %1419 = vmatprep.subr.bf16.mxu0 0
    %1420 = vmatpush1.bf16.msra.mxu0 0
    %1421 = vmatprep.subr.bf16.mxu0 0
    %1422 = vmatpush1.bf16.msra.mxu0 0
    %1423 = vmatprep.subr.bf16.mxu0 0
    %1424 = vmatpush1.bf16.msra.mxu0 0
    %1425 = vmatprep.subr.bf16.mxu0 0
    %1426 = vmatpush1.bf16.msra.mxu0 0
    %1427 = vmatprep.subr.bf16.mxu0 0
    %1428 = vmatpush1.bf16.msra.mxu0 0
    %1429 = vmatprep.subr.bf16.mxu0 0
    %1430 = vmatpush1.bf16.msra.mxu0 0
    %1431 = vmatprep.mubr.bf16.mxu0 0
    %1432 = vmatmul.mubr.bf16.gmra.mrb[0].mxu0 %v1397
    %v1433 = vpop.f32.mrb[0].mxu0
    %v1434 = vadd.f32 %v1371, %v1433
    %v1435 = vpop.f32.mrb[0].mxu0
    %v1436 = vpop.f32.mrb[0].mxu0
    %v1437 = vpop.f32.mrb[0].mxu0
    %1438 = vdwg.mxu0
    %v1439 = vld [vmem:[%s0 + $0xa0] sm:$0xf]
    %v1440 = vld [vmem:[%s0 + $0xa4] sm:$0xf]
    %v1441 = vld [vmem:[%s0 + $0xa8] sm:$0xf]
    %v1442 = vld [vmem:[%s0 + $0xac] sm:$0xf]
    %v1443 = vpack.c.bf16 %v1252, %v1252
    %v1444 = vlaneseq
    %v1445 = vshrl.u32 %v1444, 7
    %v1446 = vsub.s32 2, %v1445
    %v1447 = vrot.slane %v38, %v1446
    %v1452 = vunpack.c.l.b16 %v1439
    %v1453 = vunpack.c.l.b16 %v1440
    %v1454 = vunpack.c.l.b16 %v1441
    %v1455 = vunpack.c.l.b16 %v1442
    %v1456 = vpack.c.b16 %v1453, %v1452
    %v1457 = vpack.c.b16 %v1455, %v1454
    %v1461 = vsel %vm48, %v1443, 0
    %1463 = vmatprep.subr.bf16.mxu0 0
    %1464 = vmatpush1.bf16.msra.mxu0 %v1456
    %1465 = vmatprep.subr.bf16.mxu0 0
    %1466 = vmatpush1.bf16.msra.mxu0 %v1457
    %1467 = vmatprep.subr.bf16.mxu0 0
    %1468 = vmatpush1.bf16.msra.mxu0 0
    %1469 = vmatprep.subr.bf16.mxu0 0
    %1470 = vmatpush1.bf16.msra.mxu0 0
    %1471 = vmatprep.subr.bf16.mxu0 0
    %1472 = vmatpush1.bf16.msra.mxu0 0
    %1473 = vmatprep.subr.bf16.mxu0 0
    %1474 = vmatpush1.bf16.msra.mxu0 0
    %1475 = vmatprep.subr.bf16.mxu0 0
    %1476 = vmatpush1.bf16.msra.mxu0 0
    %1477 = vmatprep.subr.bf16.mxu0 0
    %1478 = vmatpush1.bf16.msra.mxu0 0
    %1479 = vmatprep.subr.bf16.mxu0 0
    %1480 = vmatpush1.bf16.msra.mxu0 0
    %1481 = vmatprep.subr.bf16.mxu0 0
    %1482 = vmatpush1.bf16.msra.mxu0 0
    %1483 = vmatprep.subr.bf16.mxu0 0
    %1484 = vmatpush1.bf16.msra.mxu0 0
    %1485 = vmatprep.subr.bf16.mxu0 0
    %1486 = vmatpush1.bf16.msra.mxu0 0
    %1487 = vmatprep.subr.bf16.mxu0 0
    %1488 = vmatpush1.bf16.msra.mxu0 0
    %1489 = vmatprep.subr.bf16.mxu0 0
    %1490 = vmatpush1.bf16.msra.mxu0 0
    %1491 = vmatprep.subr.bf16.mxu0 0
    %1492 = vmatpush1.bf16.msra.mxu0 0
    %1493 = vmatprep.subr.bf16.mxu0 0
    %1494 = vmatpush1.bf16.msra.mxu0 0
    %1495 = vmatprep.mubr.bf16.mxu0 0
    %1496 = vmatmul.mubr.bf16.gmra.mrb[0].mxu0 %v1461
    %v1497 = vpop.f32.mrb[0].mxu0
    %v1498 = vadd.f32 %v1447, %v1497
    %v1499 = vpop.f32.mrb[0].mxu0
    %v1500 = vpop.f32.mrb[0].mxu0
    %v1501 = vpop.f32.mrb[0].mxu0
    %1502 = vdwg.mxu0
    %v1503 = vsel %vm1319, %v1498, 0.0
    %v1504 = vrot.slane %v1503, 4
    %v1505 = vadd.f32 %v1503, %v1504
    %v1506 = vrot.slane %v1505, 2
    %v1507 = vadd.f32 %v1505, %v1506
    %v1508 = vrot.slane %v1507, 1
    %v1509 = vadd.f32 %v1507, %v1508
    %v1510 = vmul.f32 %v1509, %v1327
    %v1511 = vsub.f32 %v1498, %v1510
    %v1512 = vmul.f32 %v1511, %v1511
    %v1513 = vsel %vm1319, %v1512, 0.0
    %v1514 = vrot.slane %v1513, 4
    %v1515 = vadd.f32 %v1513, %v1514
    %v1516 = vrot.slane %v1515, 2
    %v1517 = vadd.f32 %v1515, %v1516
    %v1518 = vrot.slane %v1517, 1
    %v1519 = vadd.f32 %v1517, %v1518
    %v1520 = vmul.f32 %v1519, %v1327
    %v1521 = vadd.f32 %v1520, 1e-05
    %v1522 = vrsqrt.pop %v1521
    %v1523 = vmul.f32 %v1511, %v1522
    %v1524 = vlaneseq
    %v1525 = vshrl.u32 %v1524, 7
    %v1526 = vsub.s32 3, %v1525
    %v1527 = vrot.slane %v38, %v1526
    %v1528 = vmul.f32 %v1523, %v1527
    %v1529 = vlaneseq
    %v1530 = vshrl.u32 %v1529, 7
    %v1531 = vsub.s32 4, %v1530
    %v1532 = vrot.slane %v38, %v1531
    %v1533 = vadd.f32 %v1528, %v1532
    %vm1534 = vcmp.gt.f32.partialorder %v1533, 0.0
    %v1535 = vlaneseq
    %v1536 = vshrl.u32 %v1535, 7
    %v1537 = vsub.s32 5, %v1536
    %v1538 = vrot.slane %v38, %v1537
    %v1539 = vmul.f32 %v1538, %v1533
    %v1540 = vsel %vm1534, %v1533, %v1539
    %v1541 = vld [vmem:[%s0 + $0xb0] sm:$0xf]
    %v1542 = vld [vmem:[%s0 + $0xb4] sm:$0xf]
    %v1543 = vld [vmem:[%s0 + $0xb8] sm:$0xf]
    %v1544 = vld [vmem:[%s0 + $0xbc] sm:$0xf]
    %v1545 = vld [vmem:[%s0 + $0xc0] sm:$0xf]
    %v1546 = vld [vmem:[%s0 + $0xc4] sm:$0xf]
    %v1547 = vld [vmem:[%s0 + $0xc8] sm:$0xf]
    %v1548 = vld [vmem:[%s0 + $0xcc] sm:$0xf]
    %v1549 = vpack.c.bf16 %v1540, %v1540
    %v1550 = vlaneseq
    %v1551 = vshrl.u32 %v1550, 7
    %v1552 = vsub.s32 6, %v1551
    %v1553 = vrot.slane %v38, %v1552
    %v1562 = vunpack.c.l.b16 %v1541
    %v1563 = vunpack.c.l.b16 %v1542
    %v1564 = vunpack.c.l.b16 %v1543
    %v1565 = vunpack.c.l.b16 %v1544
    %v1566 = vunpack.c.l.b16 %v1545
    %v1567 = vunpack.c.l.b16 %v1546
    %v1568 = vunpack.c.l.b16 %v1547
    %v1569 = vunpack.c.l.b16 %v1548
    %v1570 = vpack.c.b16 %v1563, %v1562
    %v1571 = vpack.c.b16 %v1565, %v1564
    %v1572 = vpack.c.b16 %v1567, %v1566
    %v1573 = vpack.c.b16 %v1569, %v1568
    %v1579 = vsel %vm292, %v1549, 0
    %1581 = vmatprep.subr.bf16.mxu0 0
    %1582 = vmatpush1.bf16.msra.mxu0 %v1570
    %1583 = vmatprep.subr.bf16.mxu0 0
    %1584 = vmatpush1.bf16.msra.mxu0 %v1571
    %1585 = vmatprep.subr.bf16.mxu0 0
    %1586 = vmatpush1.bf16.msra.mxu0 %v1572
    %1587 = vmatprep.subr.bf16.mxu0 0
    %1588 = vmatpush1.bf16.msra.mxu0 %v1573
    %1589 = vmatprep.subr.bf16.mxu0 0
    %1590 = vmatpush1.bf16.msra.mxu0 0
    %1591 = vmatprep.subr.bf16.mxu0 0
    %1592 = vmatpush1.bf16.msra.mxu0 0
    %1593 = vmatprep.subr.bf16.mxu0 0
    %1594 = vmatpush1.bf16.msra.mxu0 0
    %1595 = vmatprep.subr.bf16.mxu0 0
    %1596 = vmatpush1.bf16.msra.mxu0 0
    %1597 = vmatprep.subr.bf16.mxu0 0
    %1598 = vmatpush1.bf16.msra.mxu0 0
    %1599 = vmatprep.subr.bf16.mxu0 0
    %1600 = vmatpush1.bf16.msra.mxu0 0
    %1601 = vmatprep.subr.bf16.mxu0 0
    %1602 = vmatpush1.bf16.msra.mxu0 0
    %1603 = vmatprep.subr.bf16.mxu0 0
    %1604 = vmatpush1.bf16.msra.mxu0 0
    %1605 = vmatprep.subr.bf16.mxu0 0
    %1606 = vmatpush1.bf16.msra.mxu0 0
    %1607 = vmatprep.subr.bf16.mxu0 0
    %1608 = vmatpush1.bf16.msra.mxu0 0
    %1609 = vmatprep.subr.bf16.mxu0 0
    %1610 = vmatpush1.bf16.msra.mxu0 0
    %1611 = vmatprep.subr.bf16.mxu0 0
    %1612 = vmatpush1.bf16.msra.mxu0 0
    %1613 = vmatprep.mubr.bf16.mxu0 0
    %1614 = vmatmul.mubr.bf16.gmra.mrb[0].mxu0 %v1579
    %v1615 = vpop.f32.mrb[0].mxu0
    %v1616 = vadd.f32 %v1553, %v1615
    %v1617 = vpop.f32.mrb[0].mxu0
    %v1618 = vpop.f32.mrb[0].mxu0
    %v1619 = vpop.f32.mrb[0].mxu0
    %1620 = vdwg.mxu0
    %v1621 = vmul.f32 %v1434, %v1434
    %vm1622 = vcmask 257024
    %v1623 = vsel %vm1622, %v1621, 0.0
    %1624 = vadd.xlane.f32.xlu0 %v1623
    %v1625 = vpop.xlane.xlu0 %1624
    %v1626 = vmax.f32 %v1625, 1e-24
    %v1627 = vrsqrt.pop %v1626
    %v1628 = vmul.f32 %v1434, %v1627
    %v1629 = vmul.f32 %v1616, %v1616
    %v1630 = vsel %vm1622, %v1629, 0.0
    %1631 = vadd.xlane.f32.xlu0 %v1630
    %v1632 = vpop.xlane.xlu0 %1631
    %v1633 = vmax.f32 %v1632, 1e-24
    %v1634 = vrsqrt.pop %v1633
    %v1635 = vmul.f32 %v1616, %v1634
    %v1636 = vmul.f32 %v1628, %v1635
    %v1637 = vsel %vm1622, %v1636, 0.0
    %1638 = vadd.xlane.f32.xlu0 %v1637
    %v1639 = vpop.xlane.xlu0 %1638
    %v1640 = vmul.f32 %v1639, 2.0
    %v1641 = vsub.f32 2.0, %v1640
    %vm1642 = vcmask 1043456
    %v1643 = vsel %vm1642, %v1641, 0.0
    %v1644 = vrot.slane %v1643, 4
    %v1645 = vadd.f32 %v1643, %v1644
    %v1646 = vrot.slane %v1645, 2
    %v1647 = vadd.f32 %v1645, %v1646
    %v1648 = vrot.slane %v1647, 1
    %v1649 = vadd.f32 %v1647, %v1648
    %v1650 = vmul.f32 %v1649, %v1327
    %v1651 = vsel %vm48, %v1249, 0.0
    %v1653 = vrot.slane %v1651, 4
    %v1655 = vsel %vm1642, %v1653, %v1650
    %vm1656 = vcmask 1044480
    %v1657 = vsel %vm1656, %v1655, 0.0
    %1658 = vst [vmem:[%s5] sm:$0xff] %v1657
    // Predicated region
    $region26: #{forward.1} parent=1 // pred_check
      _
    $region27: #{forward.1} parent=1 // pred_check_branch
      %1660 = sbr.rel (0) target = $region29
    $region28: #{forward.1} parent=1 // pred_region
      _
    $region29: #{forward.1} parent=1 // pred_fallthru
      _
    // Predicated region
    $region30: #{forward.1} parent=1 // pred_check
      _
    $region31: #{forward.1} parent=1 // pred_check_branch
      %1662 = sbr.rel (0) target = $region33
    $region32: #{forward.1} parent=1 // pred_region
      _
    $region33: #{forward.1} parent=1 // pred_fallthru
      _
    %1663 = vsyncpa [#allocation3], 1

</llo_original>
